<compile_context>
chip_gen: v5e
topology: v5e:2x2
jax: 0.10.0
libtpu: 0.0.40
codegen_flags: <defaults>
</compile_context>

<pallas_src>
import jax
import jax.numpy as jnp
import numpy as np
from jax.experimental import pallas as pl
from jax.experimental.pallas import tpu as pltpu

BN_EPS = 1e-5
LANE = 128
PADL = 8  # left zero-pad columns in the depthwise scratch (keeps the interior store aligned)


def _round_up(x, m):
    return ((x + m - 1) // m) * m


# ----------------------------------------------------------------------------- kernel
def _make_kernel(H, W, Ho, Wo, stride, has_expand, use_res, out_dtype, mxu_dtype):
    def kernel(x_ref, w1_ref, b1_ref, wdw_ref, b2_ref, w3_ref, b3_ref, o_ref, pad_ref):
        cin = x_ref.shape[-1]
        chid = wdw_ref.shape[-1]
        cout = w3_ref.shape[-1]

        x = x_ref[0].astype(jnp.float32)                         # (H, W, Cin_p)

        # ---- 1x1 expand conv (BN scale pre-folded into w1) + bias + ReLU ----
        if has_expand:
            hid = jnp.dot(x.reshape(H * W, cin).astype(mxu_dtype), w1_ref[...],
                          preferred_element_type=jnp.float32)
            hid = jnp.maximum(hid + b1_ref[...], 0.0).reshape(H, W, chid)
        else:
            hid = x

        # ---- 3x3 depthwise conv, padding=1 (BN scale pre-folded into wdw) ----
        wdw = wdw_ref[...]                                       # (3, 3, Chid) loaded once

        # Scratch layout: hid lives at sublane columns [PADL, PADL+W); one zero column on
        # each side supplies the W-direction conv border.  The interior store is 8-aligned
        # (unmasked vst) and only two thin border columns are zeroed per step (safe under
        # "parallel" grid semantics, unlike a step-0-only init).
        pad_ref[:, PADL - 1:PADL, :] = jnp.zeros((H, 1, chid), jnp.float32)
        pad_ref[:, PADL + W:PADL + W + 1, :] = jnp.zeros((H, 1, chid), jnp.float32)
        pad_ref[:, PADL:PADL + W, :] = hid

        # W-shifted taps: cols[kw][h, w] = hid[h, w + kw - 1] (zero outside).  Center tap
        # reuses the in-register value; only the +/-1 shifts touch the scratch.
        cols = [
            pad_ref[:, PADL - 1:PADL - 1 + W, :],
            hid,
            pad_ref[:, PADL + 1:PADL + 1 + W, :],
        ]

        def shift_h(a, dh):                                      # b[h, w] = a[h + dh, w]
            if dh == 0:
                return a
            z = jnp.zeros((1, W, chid), jnp.float32)
            if dh > 0:
                return jnp.concatenate([a[dh:], z], axis=0)
            return jnp.concatenate([z, a[:dh]], axis=0)

        acc = jnp.zeros((H, W, chid), jnp.float32)               # dense (stride-1) map
        for kw in range(3):
            col = cols[kw]
            for kh in range(3):
                acc = acc + shift_h(col, kh - 1) * wdw[kh, kw:kw + 1, :]

        if stride == 1:
            acc_s = acc
        else:
            # Dense compute, then one strided subsample read from the aligned scratch.
            pad_ref[:, 0:W, :] = acc
            acc_s = pad_ref[pl.ds(0, Ho, stride), pl.ds(0, Wo, stride), :]

        hid2 = jnp.maximum(acc_s + b2_ref[...], 0.0)             # (Ho, Wo, Chid)

        # ---- 1x1 projection conv (BN scale pre-folded into w3) + bias, linear ----
        out = jnp.dot(hid2.reshape(Ho * Wo, chid).astype(mxu_dtype), w3_ref[...],
                      preferred_element_type=jnp.float32)
        out = (out + b3_ref[...]).reshape(Ho, Wo, cout)

        if use_res:                                              # static: stride==1, inp==oup
            out = out + x

        o_ref[0] = out.astype(out_dtype)

    return kernel


# ----------------------------------------------------------------------------- wrappers
def inverted_residual_forward_nhwc(x_nhwc, params, meta, *, stride, expand_ratio):
    """x_nhwc: (N, H, W, Cin) channels-last. Returns (N, Ho, Wo, Cout)."""
    N, H, W, Cin = x_nhwc.shape
    assert Cin == meta["cin"]
    cin_p, chid_p, cout_p = meta["cin_p"], meta["chid_p"], meta["cout_p"]
    Ho = (H - 1) // stride + 1                                   # k=3, pad=1
    Wo = (W - 1) // stride + 1
    has_expand = expand_ratio != 1
    use_res = (stride == 1) and (meta["cin"] == meta["cout"])
    mxu_dtype = params["w1"].dtype

    x_p = x_nhwc if cin_p == Cin else jnp.pad(
        x_nhwc, ((0, 0), (0, 0), (0, 0), (0, cin_p - Cin)))

    kernel = _make_kernel(H, W, Ho, Wo, stride, has_expand, use_res,
                          x_nhwc.dtype, mxu_dtype)

    def _const_spec(shape):
        zeros = (0,) * len(shape)
        return pl.BlockSpec(shape, lambda n, _z=zeros: _z)

    in_specs = [
        pl.BlockSpec((1, H, W, cin_p), lambda n: (n, 0, 0, 0)),  # x (lane-dense channels)
        _const_spec((cin_p, chid_p)),                            # w1  (BN-folded, MXU dtype)
        _const_spec((1, chid_p)),                                # b1
        _const_spec((3, 3, chid_p)),                             # wdw (BN-folded)
        _const_spec((1, chid_p)),                                # b2
        _const_spec((chid_p, cout_p)),                           # w3  (BN-folded, MXU dtype)
        _const_spec((1, cout_p)),                                # b3
    ]
    out_spec = pl.BlockSpec((1, Ho, Wo, cout_p), lambda n: (n, 0, 0, 0))
    scratch = (pltpu.VMEM((H, W + 2 * PADL, chid_p), jnp.float32),)

    # Rough per-step VMEM footprint (double-buffered blocks + scratch + spill headroom).
    itemsize = jnp.dtype(mxu_dtype).itemsize
    est = (2 * H * W * cin_p * 4
           + 2 * Ho * Wo * cout_p * 4
           + 2 * (cin_p * chid_p + chid_p * cout_p) * itemsize
           + H * (W + 2 * PADL) * chid_p * 4
           + 8 * H * W * chid_p * 4)
    vmem_limit = int(min(max(2 * est, 16 << 20), 48 << 20))      # stay under v7x 64 MiB

    out_p = pl.pallas_call(
        kernel,
        out_shape=jax.ShapeDtypeStruct((N, Ho, Wo, cout_p), x_nhwc.dtype),
        grid_spec=pltpu.PrefetchScalarGridSpec(
            num_scalar_prefetch=0,
            grid=(N,),
            in_specs=in_specs,
            out_specs=out_spec,
            scratch_shapes=scratch,
        ),
        compiler_params=pltpu.CompilerParams(
            dimension_semantics=("parallel",),                   # v7x: shard batch over 2 TCs
            vmem_limit_bytes=vmem_limit,
        ),
    )(x_p, params["w1"], params["b1"], params["wdw"], params["b2"],
      params["w3"], params["b3"])

    return out_p[..., :meta["cout"]]


def inverted_residual_forward(x_nchw, params, meta, *, stride, expand_ratio):
    """PyTorch-convention NCHW wrapper (transposes only for the test harness)."""
    x_nhwc = jnp.transpose(x_nchw, (0, 2, 3, 1))
    out = inverted_residual_forward_nhwc(x_nhwc, params, meta,
                                         stride=stride, expand_ratio=expand_ratio)
    return jnp.transpose(out, (0, 3, 1, 2))


# ----------------------------------------------------------------------------- params
def init_raw_params(key, inp, oup, expand_ratio):
    """Deterministic synthetic PyTorch-shaped weights; eval-mode BN as (scale, bias)."""
    hidden = int(inp * expand_ratio)
    ks = jax.random.split(key, 8)

    def bn_fold(k, c):
        kg, kb, km, kv = jax.random.split(k, 4)
        gamma = jax.random.uniform(kg, (c,), jnp.float32, 0.5, 1.5)
        beta = 0.1 * jax.random.normal(kb, (c,), jnp.float32)
        mean = 0.1 * jax.random.normal(km, (c,), jnp.float32)
        var = jax.random.uniform(kv, (c,), jnp.float32, 0.5, 1.5)
        scale = gamma / jnp.sqrt(var + BN_EPS)
        return scale, beta - mean * scale

    w1_pt = 0.1 * jax.random.normal(ks[0], (hidden, inp, 1, 1), jnp.float32)
    wdw_pt = 0.1 * jax.random.normal(ks[1], (hidden, 1, 3, 3), jnp.float32)
    w3_pt = 0.1 * jax.random.normal(ks[2], (oup, hidden, 1, 1), jnp.float32)
    s1, b1 = bn_fold(ks[3], hidden)
    s2, b2 = bn_fold(ks[4], hidden)
    s3, b3 = bn_fold(ks[5], oup)
    return dict(w1_pt=w1_pt, wdw_pt=wdw_pt, w3_pt=w3_pt, s1=s1, b1=b1,
                s2=s2, b2=b2, s3=s3, b3=b3, hidden=hidden, inp=inp, oup=oup)


def prepare_params(raw, *, mxu_dtype=jnp.bfloat16):
    """Fold BN scales into conv weights, pad channels to lane width, cast MXU weights."""
    inp, oup, hidden = raw["inp"], raw["oup"], raw["hidden"]
    cin_p, chid_p, cout_p = (_round_up(c, LANE) for c in (inp, hidden, oup))

    w1 = jnp.transpose(raw["w1_pt"][:, :, 0, 0], (1, 0)) * raw["s1"][None, :]       # (Cin, Chid)
    wdw = jnp.transpose(raw["wdw_pt"][:, 0], (1, 2, 0)) * raw["s2"][None, None, :]  # (3, 3, Chid)
    w3 = jnp.transpose(raw["w3_pt"][:, :, 0, 0], (1, 0)) * raw["s3"][None, :]       # (Chid, Cout)

    pad2 = lambda a, r, c: jnp.pad(a, ((0, r - a.shape[0]), (0, c - a.shape[1])))
    pad1 = lambda a, c: jnp.pad(a, (0, c - a.shape[0]))

    params = dict(
        w1=pad2(w1, cin_p, chid_p).astype(mxu_dtype),
        b1=pad1(raw["b1"], chid_p).reshape(1, chid_p),
        wdw=jnp.pad(wdw, ((0, 0), (0, 0), (0, chid_p - hidden))),
        b2=pad1(raw["b2"], chid_p).reshape(1, chid_p),
        w3=pad2(w3, chid_p, cout_p).astype(mxu_dtype),
        b3=pad1(raw["b3"], cout_p).reshape(1, cout_p),
    )
    meta = dict(cin=inp, chid=hidden, cout=oup,
                cin_p=cin_p, chid_p=chid_p, cout_p=cout_p)
    return params, meta


# ----------------------------------------------------------------------------- reference
def reference(x, raw, *, stride, expand_ratio):
    """Pure-JAX NCHW reference mirroring the PyTorch module (eval-mode BN)."""
    hidden = raw["hidden"]
    dn = ("NCHW", "OIHW", "NCHW")
    bn = lambda y, s, b: y * s[None, :, None, None] + b[None, :, None, None]

    h = x
    if expand_ratio != 1:
        h = jax.lax.conv_general_dilated(h, raw["w1_pt"], (1, 1), "VALID",
                                         dimension_numbers=dn)
        h = jax.nn.relu(bn(h, raw["s1"], raw["b1"]))
    h = jax.lax.conv_general_dilated(h, raw["wdw_pt"], (stride, stride),
                                     ((1, 1), (1, 1)), dimension_numbers=dn,
                                     feature_group_count=hidden)
    h = jax.nn.relu(bn(h, raw["s2"], raw["b2"]))
    h = jax.lax.conv_general_dilated(h, raw["w3_pt"], (1, 1), "VALID",
                                     dimension_numbers=dn)
    h = bn(h, raw["s3"], raw["b3"])
    if stride == 1 and raw["inp"] == raw["oup"]:
        h = x + h
    return h


# ----------------------------------------------------------------------------- main
if __name__ == "__main__":
    key = jax.random.PRNGKey(0)
    cases = [
        # inp oup  H   W  stride  t   mxu_dtype      rtol  atol
        (4,   4,  16, 16, 1,      6,  jnp.bfloat16,  2e-2, 2e-2),  # residual block, bf16 MXU
        (4,   4,  16, 16, 1,      6,  jnp.float32,   1e-3, 1e-3),  # same block, strict f32 check
        (4,   8,  16, 16, 2,      6,  jnp.bfloat16,  2e-2, 2e-2),  # stride-2 / no-residual block
    ]
    for idx, (inp, oup, H, W, stride, t, mxu, rtol, atol) in enumerate(cases):
        kx, kp = jax.random.split(jax.random.fold_in(key, idx))
        x = jax.random.normal(kx, (2, inp, H, W), jnp.float32)
        raw = init_raw_params(kp, inp, oup, t)
        params, meta = prepare_params(raw, mxu_dtype=mxu)

        out = jax.block_until_ready(
            inverted_residual_forward(x, params, meta, stride=stride, expand_ratio=t))
        ref = reference(x, raw, stride=stride, expand_ratio=t)
        np.testing.assert_allclose(np.asarray(out), np.asarray(ref), rtol=rtol, atol=atol)

    print("KERNEL_OK")
</pallas_src>

<mosaic_0001>
module attributes {stable_mosaic.version = 11 : i64} {
  func.func @kernel(%arg0: i32, %arg1: memref<1x16x16x128xf32, #tpu.memory_space<vmem>>, %arg2: memref<128x128xbf16, #tpu.memory_space<vmem>>, %arg3: memref<1x128xf32, #tpu.memory_space<vmem>>, %arg4: memref<3x3x128xf32, #tpu.memory_space<vmem>>, %arg5: memref<1x128xf32, #tpu.memory_space<vmem>>, %arg6: memref<128x128xbf16, #tpu.memory_space<vmem>>, %arg7: memref<1x128xf32, #tpu.memory_space<vmem>>, %arg8: memref<1x16x16x128xf32, #tpu.memory_space<vmem>>, %arg9: memref<16x32x128xf32, #tpu.memory_space<vmem>>) attributes {dimension_semantics = [#tpu.dimension_semantics<parallel>], iteration_bounds = array<i64: 2>, scalar_prefetch = 0 : i64, scratch_operands = 1 : i64, tpu.core_type = #tpu.core_type<tc>, window_params = [{transform_indices = @transform_0, window_bounds = array<i64: 1, 16, 16, 128>}, {pipeline_mode = #tpu.pipeline_mode<synchronous>, transform_indices = @transform_1, window_bounds = array<i64: 128, 128>}, {pipeline_mode = #tpu.pipeline_mode<synchronous>, transform_indices = @transform_2, window_bounds = array<i64: 1, 128>}, {pipeline_mode = #tpu.pipeline_mode<synchronous>, transform_indices = @transform_3, window_bounds = array<i64: 3, 3, 128>}, {pipeline_mode = #tpu.pipeline_mode<synchronous>, transform_indices = @transform_4, window_bounds = array<i64: 1, 128>}, {pipeline_mode = #tpu.pipeline_mode<synchronous>, transform_indices = @transform_5, window_bounds = array<i64: 128, 128>}, {pipeline_mode = #tpu.pipeline_mode<synchronous>, transform_indices = @transform_6, window_bounds = array<i64: 1, 128>}, {transform_indices = @transform_7, window_bounds = array<i64: 1, 16, 16, 128>}]} {
    %c0 = arith.constant 0 : index
    %c0_0 = arith.constant 0 : index
    %c0_1 = arith.constant 0 : index
    %c0_2 = arith.constant 0 : index
    %0 = vector.load %arg1[%c0, %c0_0, %c0_1, %c0_2] : memref<1x16x16x128xf32, #tpu.memory_space<vmem>>, vector<1x16x16x128xf32>
    %1 = vector.shape_cast %0 : vector<1x16x16x128xf32> to vector<16x16x128xf32>
    %2 = vector.shape_cast %1 : vector<16x16x128xf32> to vector<256x128xf32>
    %3 = arith.truncf %2 : vector<256x128xf32> to vector<256x128xbf16>
    %c0_3 = arith.constant 0 : index
    %c0_4 = arith.constant 0 : index
    %4 = vector.load %arg2[%c0_3, %c0_4] : memref<128x128xbf16, #tpu.memory_space<vmem>>, vector<128x128xbf16>
    %cst = arith.constant dense<0.000000e+00> : vector<256x128xf32>
    %5 = tpu.matmul %3, %4, %cst {dimension_numbers = #tpu.dot_dimension_numbers<[1], [0], [0], [1], [0, 0, 1, 1], [], []>} : vector<256x128xbf16>, vector<128x128xbf16>, vector<256x128xf32> -> vector<256x128xf32>
    %c0_5 = arith.constant 0 : index
    %c0_6 = arith.constant 0 : index
    %6 = vector.load %arg3[%c0_5, %c0_6] : memref<1x128xf32, #tpu.memory_space<vmem>>, vector<1x128xf32>
    %7 = vector.broadcast %6 : vector<1x128xf32> to vector<256x128xf32>
    %8 = arith.addf %5, %7 : vector<256x128xf32>
    %cst_7 = arith.constant 0.000000e+00 : f32
    %9 = vector.broadcast %cst_7 : f32 to vector<256x128xf32>
    %10 = arith.maximumf %8, %9 : vector<256x128xf32>
    %11 = vector.shape_cast %10 : vector<256x128xf32> to vector<16x16x128xf32>
    %c0_8 = arith.constant 0 : index
    %c0_9 = arith.constant 0 : index
    %c0_10 = arith.constant 0 : index
    %12 = vector.load %arg4[%c0_8, %c0_9, %c0_10] : memref<3x3x128xf32, #tpu.memory_space<vmem>>, vector<3x3x128xf32>
    %cst_11 = arith.constant 0.000000e+00 : f32
    %13 = vector.broadcast %cst_11 : f32 to vector<16x1x128xf32>
    %c0_12 = arith.constant 0 : index
    %c7 = arith.constant 7 : index
    %c0_13 = arith.constant 0 : index
    %14 = vector.load %arg9[%c0_12, %c7, %c0_13] : memref<16x32x128xf32, #tpu.memory_space<vmem>>, vector<16x1x128xf32>
    tpu.vector_store %arg9[%c0_12, %c7, %c0_13], %13 {strides = array<i32>} : memref<16x32x128xf32, #tpu.memory_space<vmem>>, vector<16x1x128xf32>,
    %cst_14 = arith.constant 0.000000e+00 : f32
    %15 = vector.broadcast %cst_14 : f32 to vector<16x1x128xf32>
    %c0_15 = arith.constant 0 : index
    %c24 = arith.constant 24 : index
    %c0_16 = arith.constant 0 : index
    %16 = vector.load %arg9[%c0_15, %c24, %c0_16] : memref<16x32x128xf32, #tpu.memory_space<vmem>>, vector<16x1x128xf32>
    tpu.vector_store %arg9[%c0_15, %c24, %c0_16], %15 {strides = array<i32>} : memref<16x32x128xf32, #tpu.memory_space<vmem>>, vector<16x1x128xf32>,
    %c0_17 = arith.constant 0 : index
    %c8 = arith.constant 8 : index
    %c0_18 = arith.constant 0 : index
    %17 = vector.load %arg9[%c0_17, %c8, %c0_18] : memref<16x32x128xf32, #tpu.memory_space<vmem>>, vector<16x16x128xf32>
    tpu.vector_store %arg9[%c0_17, %c8, %c0_18], %11 {strides = array<i32>} : memref<16x32x128xf32, #tpu.memory_space<vmem>>, vector<16x16x128xf32>,
    %c0_19 = arith.constant 0 : index
    %c7_20 = arith.constant 7 : index
    %c0_21 = arith.constant 0 : index
    %18 = vector.load %arg9[%c0_19, %c7_20, %c0_21] : memref<16x32x128xf32, #tpu.memory_space<vmem>>, vector<16x16x128xf32>
    %c0_22 = arith.constant 0 : index
    %c9 = arith.constant 9 : index
    %c0_23 = arith.constant 0 : index
    %19 = vector.load %arg9[%c0_22, %c9, %c0_23] : memref<16x32x128xf32, #tpu.memory_space<vmem>>, vector<16x16x128xf32>
    %cst_24 = arith.constant 0.000000e+00 : f32
    %20 = vector.broadcast %cst_24 : f32 to vector<16x16x128xf32>
    %cst_25 = arith.constant 0.000000e+00 : f32
    %21 = vector.broadcast %cst_25 : f32 to vector<1x16x128xf32>
    %22 = vector.extract_strided_slice %18 {offsets = [0, 0, 0], sizes = [15, 16, 128], strides = [1, 1, 1]} : vector<16x16x128xf32> to vector<15x16x128xf32>
    %23 = tpu.concatenate %21, %22 in 0 : vector<1x16x128xf32>, vector<15x16x128xf32> -> vector<16x16x128xf32>
    %24 = vector.extract_strided_slice %12 {offsets = [0, 0, 0], sizes = [1, 1, 128], strides = [1, 1, 1]} : vector<3x3x128xf32> to vector<1x1x128xf32>
    %25 = vector.shape_cast %24 : vector<1x1x128xf32> to vector<1x128xf32>
    %26 = vector.shape_cast %25 : vector<1x128xf32> to vector<1x1x128xf32>
    %27 = vector.broadcast %26 : vector<1x1x128xf32> to vector<16x16x128xf32>
    %28 = arith.mulf %23, %27 : vector<16x16x128xf32>
    %29 = arith.addf %20, %28 : vector<16x16x128xf32>
    %30 = vector.extract_strided_slice %12 {offsets = [1, 0, 0], sizes = [1, 1, 128], strides = [1, 1, 1]} : vector<3x3x128xf32> to vector<1x1x128xf32>
    %31 = vector.shape_cast %30 : vector<1x1x128xf32> to vector<1x128xf32>
    %32 = vector.shape_cast %31 : vector<1x128xf32> to vector<1x1x128xf32>
    %33 = vector.broadcast %32 : vector<1x1x128xf32> to vector<16x16x128xf32>
    %34 = arith.mulf %18, %33 : vector<16x16x128xf32>
    %35 = arith.addf %29, %34 : vector<16x16x128xf32>
    %cst_26 = arith.constant 0.000000e+00 : f32
    %36 = vector.broadcast %cst_26 : f32 to vector<1x16x128xf32>
    %37 = vector.extract_strided_slice %18 {offsets = [1, 0, 0], sizes = [15, 16, 128], strides = [1, 1, 1]} : vector<16x16x128xf32> to vector<15x16x128xf32>
    %38 = tpu.concatenate %37, %36 in 0 : vector<15x16x128xf32>, vector<1x16x128xf32> -> vector<16x16x128xf32>
    %39 = vector.extract_strided_slice %12 {offsets = [2, 0, 0], sizes = [1, 1, 128], strides = [1, 1, 1]} : vector<3x3x128xf32> to vector<1x1x128xf32>
    %40 = vector.shape_cast %39 : vector<1x1x128xf32> to vector<1x128xf32>
    %41 = vector.shape_cast %40 : vector<1x128xf32> to vector<1x1x128xf32>
    %42 = vector.broadcast %41 : vector<1x1x128xf32> to vector<16x16x128xf32>
    %43 = arith.mulf %38, %42 : vector<16x16x128xf32>
    %44 = arith.addf %35, %43 : vector<16x16x128xf32>
    %cst_27 = arith.constant 0.000000e+00 : f32
    %45 = vector.broadcast %cst_27 : f32 to vector<1x16x128xf32>
    %46 = vector.extract_strided_slice %11 {offsets = [0, 0, 0], sizes = [15, 16, 128], strides = [1, 1, 1]} : vector<16x16x128xf32> to vector<15x16x128xf32>
    %47 = tpu.concatenate %45, %46 in 0 : vector<1x16x128xf32>, vector<15x16x128xf32> -> vector<16x16x128xf32>
    %48 = vector.extract_strided_slice %12 {offsets = [0, 1, 0], sizes = [1, 1, 128], strides = [1, 1, 1]} : vector<3x3x128xf32> to vector<1x1x128xf32>
    %49 = vector.shape_cast %48 : vector<1x1x128xf32> to vector<1x128xf32>
    %50 = vector.shape_cast %49 : vector<1x128xf32> to vector<1x1x128xf32>
    %51 = vector.broadcast %50 : vector<1x1x128xf32> to vector<16x16x128xf32>
    %52 = arith.mulf %47, %51 : vector<16x16x128xf32>
    %53 = arith.addf %44, %52 : vector<16x16x128xf32>
    %54 = vector.extract_strided_slice %12 {offsets = [1, 1, 0], sizes = [1, 1, 128], strides = [1, 1, 1]} : vector<3x3x128xf32> to vector<1x1x128xf32>
    %55 = vector.shape_cast %54 : vector<1x1x128xf32> to vector<1x128xf32>
    %56 = vector.shape_cast %55 : vector<1x128xf32> to vector<1x1x128xf32>
    %57 = vector.broadcast %56 : vector<1x1x128xf32> to vector<16x16x128xf32>
    %58 = arith.mulf %11, %57 : vector<16x16x128xf32>
    %59 = arith.addf %53, %58 : vector<16x16x128xf32>
    %cst_28 = arith.constant 0.000000e+00 : f32
    %60 = vector.broadcast %cst_28 : f32 to vector<1x16x128xf32>
    %61 = vector.extract_strided_slice %11 {offsets = [1, 0, 0], sizes = [15, 16, 128], strides = [1, 1, 1]} : vector<16x16x128xf32> to vector<15x16x128xf32>
    %62 = tpu.concatenate %61, %60 in 0 : vector<15x16x128xf32>, vector<1x16x128xf32> -> vector<16x16x128xf32>
    %63 = vector.extract_strided_slice %12 {offsets = [2, 1, 0], sizes = [1, 1, 128], strides = [1, 1, 1]} : vector<3x3x128xf32> to vector<1x1x128xf32>
    %64 = vector.shape_cast %63 : vector<1x1x128xf32> to vector<1x128xf32>
    %65 = vector.shape_cast %64 : vector<1x128xf32> to vector<1x1x128xf32>
    %66 = vector.broadcast %65 : vector<1x1x128xf32> to vector<16x16x128xf32>
    %67 = arith.mulf %62, %66 : vector<16x16x128xf32>
    %68 = arith.addf %59, %67 : vector<16x16x128xf32>
    %cst_29 = arith.constant 0.000000e+00 : f32
    %69 = vector.broadcast %cst_29 : f32 to vector<1x16x128xf32>
    %70 = vector.extract_strided_slice %19 {offsets = [0, 0, 0], sizes = [15, 16, 128], strides = [1, 1, 1]} : vector<16x16x128xf32> to vector<15x16x128xf32>
    %71 = tpu.concatenate %69, %70 in 0 : vector<1x16x128xf32>, vector<15x16x128xf32> -> vector<16x16x128xf32>
    %72 = vector.extract_strided_slice %12 {offsets = [0, 2, 0], sizes = [1, 1, 128], strides = [1, 1, 1]} : vector<3x3x128xf32> to vector<1x1x128xf32>
    %73 = vector.shape_cast %72 : vector<1x1x128xf32> to vector<1x128xf32>
    %74 = vector.shape_cast %73 : vector<1x128xf32> to vector<1x1x128xf32>
    %75 = vector.broadcast %74 : vector<1x1x128xf32> to vector<16x16x128xf32>
    %76 = arith.mulf %71, %75 : vector<16x16x128xf32>
    %77 = arith.addf %68, %76 : vector<16x16x128xf32>
    %78 = vector.extract_strided_slice %12 {offsets = [1, 2, 0], sizes = [1, 1, 128], strides = [1, 1, 1]} : vector<3x3x128xf32> to vector<1x1x128xf32>
    %79 = vector.shape_cast %78 : vector<1x1x128xf32> to vector<1x128xf32>
    %80 = vector.shape_cast %79 : vector<1x128xf32> to vector<1x1x128xf32>
    %81 = vector.broadcast %80 : vector<1x1x128xf32> to vector<16x16x128xf32>
    %82 = arith.mulf %19, %81 : vector<16x16x128xf32>
    %83 = arith.addf %77, %82 : vector<16x16x128xf32>
    %cst_30 = arith.constant 0.000000e+00 : f32
    %84 = vector.broadcast %cst_30 : f32 to vector<1x16x128xf32>
    %85 = vector.extract_strided_slice %19 {offsets = [1, 0, 0], sizes = [15, 16, 128], strides = [1, 1, 1]} : vector<16x16x128xf32> to vector<15x16x128xf32>
    %86 = tpu.concatenate %85, %84 in 0 : vector<15x16x128xf32>, vector<1x16x128xf32> -> vector<16x16x128xf32>
    %87 = vector.extract_strided_slice %12 {offsets = [2, 2, 0], sizes = [1, 1, 128], strides = [1, 1, 1]} : vector<3x3x128xf32> to vector<1x1x128xf32>
    %88 = vector.shape_cast %87 : vector<1x1x128xf32> to vector<1x128xf32>
    %89 = vector.shape_cast %88 : vector<1x128xf32> to vector<1x1x128xf32>
    %90 = vector.broadcast %89 : vector<1x1x128xf32> to vector<16x16x128xf32>
    %91 = arith.mulf %86, %90 : vector<16x16x128xf32>
    %92 = arith.addf %83, %91 : vector<16x16x128xf32>
    %c0_31 = arith.constant 0 : index
    %c0_32 = arith.constant 0 : index
    %93 = vector.load %arg5[%c0_31, %c0_32] : memref<1x128xf32, #tpu.memory_space<vmem>>, vector<1x128xf32>
    %94 = vector.shape_cast %93 : vector<1x128xf32> to vector<1x1x128xf32>
    %95 = vector.broadcast %94 : vector<1x1x128xf32> to vector<16x16x128xf32>
    %96 = arith.addf %92, %95 : vector<16x16x128xf32>
    %cst_33 = arith.constant 0.000000e+00 : f32
    %97 = vector.broadcast %cst_33 : f32 to vector<16x16x128xf32>
    %98 = arith.maximumf %96, %97 : vector<16x16x128xf32>
    %99 = vector.shape_cast %98 : vector<16x16x128xf32> to vector<256x128xf32>
    %100 = arith.truncf %99 : vector<256x128xf32> to vector<256x128xbf16>
    %c0_34 = arith.constant 0 : index
    %c0_35 = arith.constant 0 : index
    %101 = vector.load %arg6[%c0_34, %c0_35] : memref<128x128xbf16, #tpu.memory_space<vmem>>, vector<128x128xbf16>
    %cst_36 = arith.constant dense<0.000000e+00> : vector<256x128xf32>
    %102 = tpu.matmul %100, %101, %cst_36 {dimension_numbers = #tpu.dot_dimension_numbers<[1], [0], [0], [1], [0, 0, 1, 1], [], []>} : vector<256x128xbf16>, vector<128x128xbf16>, vector<256x128xf32> -> vector<256x128xf32>
    %c0_37 = arith.constant 0 : index
    %c0_38 = arith.constant 0 : index
    %103 = vector.load %arg7[%c0_37, %c0_38] : memref<1x128xf32, #tpu.memory_space<vmem>>, vector<1x128xf32>
    %104 = vector.broadcast %103 : vector<1x128xf32> to vector<256x128xf32>
    %105 = arith.addf %102, %104 : vector<256x128xf32>
    %106 = vector.shape_cast %105 : vector<256x128xf32> to vector<16x16x128xf32>
    %107 = arith.addf %106, %1 : vector<16x16x128xf32>
    %c0_39 = arith.constant 0 : index
    %c0_40 = arith.constant 0 : index
    %c0_41 = arith.constant 0 : index
    %c0_42 = arith.constant 0 : index
    %108 = vector.load %arg8[%c0_39, %c0_40, %c0_41, %c0_42] : memref<1x16x16x128xf32, #tpu.memory_space<vmem>>, vector<1x16x16x128xf32>
    %109 = vector.shape_cast %108 : vector<1x16x16x128xf32> to vector<16x16x128xf32>
    %110 = vector.shape_cast %107 : vector<16x16x128xf32> to vector<1x16x16x128xf32>
    tpu.vector_store %arg8[%c0_39, %c0_40, %c0_41, %c0_42], %110 {strides = array<i32>} : memref<1x16x16x128xf32, #tpu.memory_space<vmem>>, vector<1x16x16x128xf32>,
    return
  }
  func.func @transform_0(%arg0: i32) -> (i32, i32, i32, i32) {
    %c0_i32 = arith.constant 0 : i32
    %c0_i32_0 = arith.constant 0 : i32
    %c0_i32_1 = arith.constant 0 : i32
    %c0_i32_2 = arith.constant 0 : i32
    return %arg0, %c0_i32, %c0_i32_0, %c0_i32_1 : i32, i32, i32, i32
  }
  func.func @transform_1(%arg0: i32) -> (i32, i32) {
    %c0_i32 = arith.constant 0 : i32
    %c0_i32_0 = arith.constant 0 : i32
    %c0_i32_1 = arith.constant 0 : i32
    return %c0_i32, %c0_i32_0 : i32, i32
  }
  func.func @transform_2(%arg0: i32) -> (i32, i32) {
    %c0_i32 = arith.constant 0 : i32
    %c0_i32_0 = arith.constant 0 : i32
    %c0_i32_1 = arith.constant 0 : i32
    return %c0_i32, %c0_i32_0 : i32, i32
  }
  func.func @transform_3(%arg0: i32) -> (i32, i32, i32) {
    %c0_i32 = arith.constant 0 : i32
    %c0_i32_0 = arith.constant 0 : i32
    %c0_i32_1 = arith.constant 0 : i32
    %c0_i32_2 = arith.constant 0 : i32
    return %c0_i32, %c0_i32_0, %c0_i32_1 : i32, i32, i32
  }
  func.func @transform_4(%arg0: i32) -> (i32, i32) {
    %c0_i32 = arith.constant 0 : i32
    %c0_i32_0 = arith.constant 0 : i32
    %c0_i32_1 = arith.constant 0 : i32
    return %c0_i32, %c0_i32_0 : i32, i32
  }
  func.func @transform_5(%arg0: i32) -> (i32, i32) {
    %c0_i32 = arith.constant 0 : i32
    %c0_i32_0 = arith.constant 0 : i32
    %c0_i32_1 = arith.constant 0 : i32
    return %c0_i32, %c0_i32_0 : i32, i32
  }
  func.func @transform_6(%arg0: i32) -> (i32, i32) {
    %c0_i32 = arith.constant 0 : i32
    %c0_i32_0 = arith.constant 0 : i32
    %c0_i32_1 = arith.constant 0 : i32
    return %c0_i32, %c0_i32_0 : i32, i32
  }
  func.func @transform_7(%arg0: i32) -> (i32, i32, i32, i32) {
    %c0_i32 = arith.constant 0 : i32
    %c0_i32_0 = arith.constant 0 : i32
    %c0_i32_1 = arith.constant 0 : i32
    %c0_i32_2 = arith.constant 0 : i32
    return %arg0, %c0_i32, %c0_i32_0, %c0_i32_1 : i32, i32, i32, i32
  }
}

</mosaic_0001>

<llo_original>
// kernel: tpu_custom_call.1
$region0: #{tpu_custom_call.1}
  #allocation0 [shape = 'u32[]', space=smem, size = 0x4, offset = 0x4, fixed_abs, tag = 'smem constant byte address 0x4 - core index']
  #allocation1 [shape = 'u32[72,128]{1,0:T(1,128)}', space=vmem, size = 0x9000, scoped, tag = 'internal scratch']
  #allocation2 [shape = 'f32[16,32,128]{2,1,0:T(8,128)}', space=vmem, size = 0x40000, scoped, tag = 'scratch operand']
  %s0 = inlined_call_operand.hbm [shape: f32[2,16,16,128], index: 0, kind: input, shape index: {}]
  %s1 = inlined_call_operand.hbm [shape: bf16[128,128], index: 1, kind: input, shape index: {}]
  %s2 = inlined_call_operand.vmem [shape: f32[1,128], index: 2, kind: input, shape index: {}]
  %s3 = inlined_call_operand.hbm [shape: f32[3,3,128], index: 3, kind: input, shape index: {}]
  %s4 = inlined_call_operand.vmem [shape: f32[1,128], index: 4, kind: input, shape index: {}]
  %s5 = inlined_call_operand.hbm [shape: bf16[128,128], index: 5, kind: input, shape index: {}]
  %s6 = inlined_call_operand.vmem [shape: f32[1,128], index: 6, kind: input, shape index: {}]
  %s7 = inlined_call_operand.hbm [shape: f32[2,16,16,128], index: 7, kind: output, shape index: {}]
  %s8 = sld [smem:[#allocation0]]
  $region77: #{tpu_custom_call.1} parent=0
    _
  %s10 = ssub.s32 1, %s8
  %s11 = scalar_select 0, %s10, %s8
  $region1: #{tpu_custom_call.1} parent=0
    #allocation3 [shape = 'u8[262144]{0}', space=vmem, size = 0x40000, scoped, tag = 'input window, operand 0']
    #allocation4 [shape = 's32[2]{0}', space=sflag, size = 0x8, scoped, tag = 'scoped memory for tpu_custom_call.1']
    #allocation5 [shape = 's32[2]{0}', space=sflag, size = 0x8, scoped, tag = 'scoped memory for tpu_custom_call.1']
    #allocation6 [shape = 'u8[32768]{0}', space=vmem, size = 0x8000, scoped, tag = 'input window, operand 1, single buffered']
    #allocation7 [shape = 's32[1]{0}', space=sflag, size = 0x4, scoped, tag = 'scoped memory for tpu_custom_call.1']
    #allocation8 [shape = 'u8[6144]{0}', space=vmem, size = 0x1800, scoped, tag = 'input window, operand 3, single buffered']
    #allocation9 [shape = 'u8[32768]{0}', space=vmem, size = 0x8000, scoped, tag = 'input window, operand 5, single buffered']
    #allocation10 [shape = 's32[1]{0}', space=sflag, size = 0x4, scoped, tag = 'scoped memory for tpu_custom_call.1']
    #allocation11 [shape = 'u8[262144]{0}', space=vmem, size = 0x40000, scoped, tag = 'output window, operand 0']
    %12 = vsyncpa [#allocation4], 0
    %s13 = scalar_lea.sflag [#allocation4], 1
    %14 = vsyncpa %s13, 0
    %15 = vsyncpa [#allocation7], 0
    %16 = vsyncpa [#allocation10], 0
    %17 = vsyncpa [#allocation5], 0
    %s18 = scalar_lea.sflag [#allocation5], 1
    %19 = vsyncpa %s18, 0
    loop: start=0, step=1, limit=4
    $region2: #{tpu_custom_call.1} parent=1 // loop_pre_header
      _
    $region3: #{tpu_custom_call.1} parent=1 // loop_header
      %s21 = sphi 0, %s25
      %p22 = scmp.ge.s32.totalorder %s21, 4
      %s31 = sphi 0, %s33
      %s34 = sphi 0, %s31
      %s35 = sphi 0, %s34
      %s51 = sphi 0, %s35
      %s55 = sphi 0, %s55
      %s57 = sphi 0, %s55
      %s58 = sphi 0, %s57
      %s72 = sphi 0, %s58
      %s76 = sphi 0, %s76
      %s78 = sphi 0, %s76
      %s79 = sphi 0, %s78
      %s93 = sphi 0, %s79
      %s97 = sphi 0, %s97
      %s99 = sphi 0, %s97
      %s100 = sphi 0, %s99
      %s114 = sphi 0, %s100
      %s118 = sphi 0, %s118
      %s120 = sphi 0, %s118
      %s121 = sphi 0, %s120
      %s135 = sphi 0, %s121
      %s139 = sphi 0, %s139
      %s141 = sphi 0, %s139
      %s142 = sphi 0, %s141
      %s156 = sphi 0, %s142
      %s160 = sphi 0, %s160
      %s162 = sphi 0, %s160
      %s163 = sphi 0, %s162
      %s177 = sphi 0, %s163
      %s183 = sphi 0, %s185
      %s186 = sphi 0, %s183
      %s187 = sphi 0, %s186
      %s203 = sphi 0, %s187
    $region4: #{tpu_custom_call.1} parent=1 // loop_header_branch
      %24 = sbr.rel (%p22) target = $region8
    $region5: #{tpu_custom_call.1} parent=1 // loop_body
      %s26 = ssub.s32 %s21, 1
      %s27 = ssub.s32 %s21, 2
      %s28 = sadd.s32 %s21, 1
      %s29 = ssub.s32 %s21, %s28
      %p30 = scmp.eq.s32.totalorder %s29, 0
      %s32 = sadd.s32 %s31, 1
      %s33 = scalar_select %p30, %s31, %s32
      %p36 = pneg %p30
      %p37 = scmp.eq.s32.totalorder %s21, 1
      %p38 = por %p36, %p37
      %p39 = scmp.ne.s32.totalorder %s31, %s34
      %p40 = scmp.eq.s32.totalorder %s21, 0
      %p41 = por %p39, %p40
      %p42 = scmp.ne.s32.totalorder %s31, %s34
      %p43 = scmp.eq.s32.totalorder %s26, 1
      %p44 = por %p42, %p43
      %p45 = scmp.ne.s32.totalorder %s34, %s35
      %p46 = scmp.eq.s32.totalorder %s26, 0
      %p47 = por %p45, %p46
      %p48 = scmp.ne.s32.totalorder %s34, %s35
      %p49 = scmp.eq.s32.totalorder %s27, 1
      %p50 = por %p48, %p49
      %p52 = scmp.ne.s32.totalorder %s35, %s51
      %p53 = scmp.eq.s32.totalorder %s27, 0
      %p54 = por %p52, %p53
      %s56 = sadd.s32 %s55, 1
      %p59 = scmp.eq.s32.totalorder %s21, 1
      %p60 = scmp.ne.s32.totalorder %s55, %s57
      %p61 = scmp.eq.s32.totalorder %s21, 0
      %p62 = por %p60, %p61
      %p63 = scmp.ne.s32.totalorder %s55, %s57
      %p64 = scmp.eq.s32.totalorder %s26, 1
      %p65 = por %p63, %p64
      %p66 = scmp.ne.s32.totalorder %s57, %s58
      %p67 = scmp.eq.s32.totalorder %s26, 0
      %p68 = por %p66, %p67
      %p69 = scmp.ne.s32.totalorder %s57, %s58
      %p70 = scmp.eq.s32.totalorder %s27, 1
      %p71 = por %p69, %p70
      %p73 = scmp.ne.s32.totalorder %s58, %s72
      %p74 = scmp.eq.s32.totalorder %s27, 0
      %p75 = por %p73, %p74
      %s77 = sadd.s32 %s76, 1
      %p80 = scmp.eq.s32.totalorder %s21, 1
      %p81 = scmp.ne.s32.totalorder %s76, %s78
      %p82 = scmp.eq.s32.totalorder %s21, 0
      %p83 = por %p81, %p82
      %p84 = scmp.ne.s32.totalorder %s76, %s78
      %p85 = scmp.eq.s32.totalorder %s26, 1
      %p86 = por %p84, %p85
      %p87 = scmp.ne.s32.totalorder %s78, %s79
      %p88 = scmp.eq.s32.totalorder %s26, 0
      %p89 = por %p87, %p88
      %p90 = scmp.ne.s32.totalorder %s78, %s79
      %p91 = scmp.eq.s32.totalorder %s27, 1
      %p92 = por %p90, %p91
      %p94 = scmp.ne.s32.totalorder %s79, %s93
      %p95 = scmp.eq.s32.totalorder %s27, 0
      %p96 = por %p94, %p95
      %s98 = sadd.s32 %s97, 1
      %p101 = scmp.eq.s32.totalorder %s21, 1
      %p102 = scmp.ne.s32.totalorder %s97, %s99
      %p103 = scmp.eq.s32.totalorder %s21, 0
      %p104 = por %p102, %p103
      %p105 = scmp.ne.s32.totalorder %s97, %s99
      %p106 = scmp.eq.s32.totalorder %s26, 1
      %p107 = por %p105, %p106
      %p108 = scmp.ne.s32.totalorder %s99, %s100
      %p109 = scmp.eq.s32.totalorder %s26, 0
      %p110 = por %p108, %p109
      %p111 = scmp.ne.s32.totalorder %s99, %s100
      %p112 = scmp.eq.s32.totalorder %s27, 1
      %p113 = por %p111, %p112
      %p115 = scmp.ne.s32.totalorder %s100, %s114
      %p116 = scmp.eq.s32.totalorder %s27, 0
      %p117 = por %p115, %p116
      %s119 = sadd.s32 %s118, 1
      %p122 = scmp.eq.s32.totalorder %s21, 1
      %p123 = scmp.ne.s32.totalorder %s118, %s120
      %p124 = scmp.eq.s32.totalorder %s21, 0
      %p125 = por %p123, %p124
      %p126 = scmp.ne.s32.totalorder %s118, %s120
      %p127 = scmp.eq.s32.totalorder %s26, 1
      %p128 = por %p126, %p127
      %p129 = scmp.ne.s32.totalorder %s120, %s121
      %p130 = scmp.eq.s32.totalorder %s26, 0
      %p131 = por %p129, %p130
      %p132 = scmp.ne.s32.totalorder %s120, %s121
      %p133 = scmp.eq.s32.totalorder %s27, 1
      %p134 = por %p132, %p133
      %p136 = scmp.ne.s32.totalorder %s121, %s135
      %p137 = scmp.eq.s32.totalorder %s27, 0
      %p138 = por %p136, %p137
      %s140 = sadd.s32 %s139, 1
      %p143 = scmp.eq.s32.totalorder %s21, 1
      %p144 = scmp.ne.s32.totalorder %s139, %s141
      %p145 = scmp.eq.s32.totalorder %s21, 0
      %p146 = por %p144, %p145
      %p147 = scmp.ne.s32.totalorder %s139, %s141
      %p148 = scmp.eq.s32.totalorder %s26, 1
      %p149 = por %p147, %p148
      %p150 = scmp.ne.s32.totalorder %s141, %s142
      %p151 = scmp.eq.s32.totalorder %s26, 0
      %p152 = por %p150, %p151
      %p153 = scmp.ne.s32.totalorder %s141, %s142
      %p154 = scmp.eq.s32.totalorder %s27, 1
      %p155 = por %p153, %p154
      %p157 = scmp.ne.s32.totalorder %s142, %s156
      %p158 = scmp.eq.s32.totalorder %s27, 0
      %p159 = por %p157, %p158
      %s161 = sadd.s32 %s160, 1
      %p164 = scmp.eq.s32.totalorder %s21, 1
      %p165 = scmp.ne.s32.totalorder %s160, %s162
      %p166 = scmp.eq.s32.totalorder %s21, 0
      %p167 = por %p165, %p166
      %p168 = scmp.ne.s32.totalorder %s160, %s162
      %p169 = scmp.eq.s32.totalorder %s26, 1
      %p170 = por %p168, %p169
      %p171 = scmp.ne.s32.totalorder %s162, %s163
      %p172 = scmp.eq.s32.totalorder %s26, 0
      %p173 = por %p171, %p172
      %p174 = scmp.ne.s32.totalorder %s162, %s163
      %p175 = scmp.eq.s32.totalorder %s27, 1
      %p176 = por %p174, %p175
      %p178 = scmp.ne.s32.totalorder %s163, %s177
      %p179 = scmp.eq.s32.totalorder %s27, 0
      %p180 = por %p178, %p179
      %s181 = ssub.s32 %s21, %s28
      %p182 = scmp.eq.s32.totalorder %s181, 0
      %s184 = sadd.s32 %s183, 1
      %s185 = scalar_select %p182, %s183, %s184
      %p188 = pneg %p182
      %p189 = scmp.eq.s32.totalorder %s21, 1
      %p190 = por %p188, %p189
      %p191 = scmp.ne.s32.totalorder %s183, %s186
      %p192 = scmp.eq.s32.totalorder %s21, 0
      %p193 = por %p191, %p192
      %p194 = scmp.ne.s32.totalorder %s183, %s186
      %p195 = scmp.eq.s32.totalorder %s26, 1
      %p196 = por %p194, %p195
      %p197 = scmp.ne.s32.totalorder %s186, %s187
      %p198 = scmp.eq.s32.totalorder %s26, 0
      %p199 = por %p197, %p198
      %p200 = scmp.ne.s32.totalorder %s186, %s187
      %p201 = scmp.eq.s32.totalorder %s27, 1
      %p202 = por %p200, %p201
      %p204 = scmp.ne.s32.totalorder %s187, %s203
      %p205 = scmp.eq.s32.totalorder %s27, 0
      %p206 = por %p204, %p205
      %p207 = scmp.le.s32.totalorder 1, %s21
      %p208 = scmp.lt.s32.totalorder %s21, 3
      %p209 = pnand %p207, %p208
      %p210 = pneg %p209
      // Predicated region
      $region9: #{tpu_custom_call.1} parent=5 // pred_check
        _
      $region10: #{tpu_custom_call.1} parent=5 // pred_check_branch
        %212 = sbr.rel (%p209) target = $region12
      $region11: #{tpu_custom_call.1} parent=5 // pred_region
        %s213 = ssub.s32 %s21, 1
        // Predicated region
        $region13: #{tpu_custom_call.1} parent=11 // pred_check
          %p214 = pneg %p68
        $region14: #{tpu_custom_call.1} parent=11 // pred_check_branch
          %216 = sbr.rel (%p214) target = $region16
        $region15: #{tpu_custom_call.1} parent=11 // pred_region
          %218 = vsyncadd [#allocation7], 0
          %s219 = sshll.u32 %s1, 4
          %s220 = int_to_ptr.hbm [resolvable:$true] %s219
          %s221 = sshll.u32 [#allocation6], 4
          %s222 = int_to_ptr.vmem [resolvable:$true] %s221
          %227 = dma.hbm_to_vmem [thread:$0]  %s220, 1024, %s222, [#allocation7], 64, 64, 4
        $region16: #{tpu_custom_call.1} parent=11 // pred_fallthru
          _
        // Predicated region
        $region17: #{tpu_custom_call.1} parent=11 // pred_check
          %p228 = pneg %p89
        $region18: #{tpu_custom_call.1} parent=11 // pred_check_branch
          %230 = sbr.rel (%p228) target = $region20
        $region19: #{tpu_custom_call.1} parent=11 // pred_region
          _
        $region20: #{tpu_custom_call.1} parent=11 // pred_fallthru
          _
        // Predicated region
        $region21: #{tpu_custom_call.1} parent=11 // pred_check
          %p231 = pneg %p110
        $region22: #{tpu_custom_call.1} parent=11 // pred_check_branch
          %233 = sbr.rel (%p231) target = $region24
        $region23: #{tpu_custom_call.1} parent=11 // pred_region
          %235 = vsyncadd [#allocation7], 0
          %s236 = sshll.u32 %s3, 4
          %s237 = int_to_ptr.hbm [resolvable:$true] %s236
          %s238 = sshll.u32 [#allocation8], 4
          %s239 = int_to_ptr.vmem [resolvable:$true] %s238
          %244 = dma.hbm_to_vmem [thread:$0]  %s237, 192, %s239, [#allocation7], 64, 64, 4
        $region24: #{tpu_custom_call.1} parent=11 // pred_fallthru
          _
        // Predicated region
        $region25: #{tpu_custom_call.1} parent=11 // pred_check
          %p245 = pneg %p131
        $region26: #{tpu_custom_call.1} parent=11 // pred_check_branch
          %247 = sbr.rel (%p245) target = $region28
        $region27: #{tpu_custom_call.1} parent=11 // pred_region
          _
        $region28: #{tpu_custom_call.1} parent=11 // pred_fallthru
          _
        // Predicated region
        $region29: #{tpu_custom_call.1} parent=11 // pred_check
          %p248 = pneg %p152
        $region30: #{tpu_custom_call.1} parent=11 // pred_check_branch
          %250 = sbr.rel (%p248) target = $region32
        $region31: #{tpu_custom_call.1} parent=11 // pred_region
          %252 = vsyncadd [#allocation10], 0
          %s253 = sshll.u32 %s5, 4
          %s254 = int_to_ptr.hbm [resolvable:$true] %s253
          %s255 = sshll.u32 [#allocation9], 4
          %s256 = int_to_ptr.vmem [resolvable:$true] %s255
          %261 = dma.hbm_to_vmem [thread:$0]  %s254, 1024, %s256, [#allocation10], 64, 64, 4
        $region32: #{tpu_custom_call.1} parent=11 // pred_fallthru
          _
        // Predicated region
        $region33: #{tpu_custom_call.1} parent=11 // pred_check
          %p262 = pneg %p173
        $region34: #{tpu_custom_call.1} parent=11 // pred_check_branch
          %264 = sbr.rel (%p262) target = $region36
        $region35: #{tpu_custom_call.1} parent=11 // pred_region
          _
        $region36: #{tpu_custom_call.1} parent=11 // pred_fallthru
          _
      $region12: #{tpu_custom_call.1} parent=5 // pred_fallthru
        _
      %p265 = scmp.lt.s32.totalorder %s21, 2
      // Predicated region
      $region37: #{tpu_custom_call.1} parent=5 // pred_check
        %p266 = pneg %p265
      $region38: #{tpu_custom_call.1} parent=5 // pred_check_branch
        %268 = sbr.rel (%p266) target = $region40
      $region39: #{tpu_custom_call.1} parent=5 // pred_region
        // Predicated region
        $region41: #{tpu_custom_call.1} parent=39 // pred_check
          %p269 = pneg %p41
        $region42: #{tpu_custom_call.1} parent=39 // pred_check_branch
          %271 = sbr.rel (%p269) target = $region44
        $region43: #{tpu_custom_call.1} parent=39 // pred_region
          %s272 = sand.u32 %s31, 1
          %s273 = scalar_lea.sflag [#allocation4], %s272
          %s274 = sand.u32 %s31, 1
          %s275 = smul.addr %s274, 256
          %s276 = scalar_lea.vmem [#allocation3], %s275
          %278 = vsyncadd %s273, 0
          %s279 = smul.addr %s21, 32
          %s280 = smul.addr %s279, 8
          %s281 = scalar_lea.hbm %s0, %s280
          %s282 = sshll.u32 %s281, 4
          %s283 = int_to_ptr.hbm [resolvable:$true] %s282
          %s284 = sshll.u32 %s276, 4
          %s285 = int_to_ptr.vmem [resolvable:$true] %s284
          %290 = dma.hbm_to_vmem [thread:$0]  %s283, 4096, %s285, %s273, 128, 128, 8
        $region44: #{tpu_custom_call.1} parent=39 // pred_fallthru
          _
      $region40: #{tpu_custom_call.1} parent=5 // pred_fallthru
        _
      %p291 = scmp.le.s32.totalorder 1, %s21
      %p292 = scmp.lt.s32.totalorder %s21, 3
      %p293 = pnand %p291, %p292
      %p294 = pneg %p293
      // Predicated region
      $region45: #{tpu_custom_call.1} parent=5 // pred_check
        _
      $region46: #{tpu_custom_call.1} parent=5 // pred_check_branch
        %296 = sbr.rel (%p293) target = $region48
      $region47: #{tpu_custom_call.1} parent=5 // pred_region
        %s297 = ssub.s32 %s21, 1
        %s298 = sand.u32 %s34, 1
        %s299 = scalar_lea.sflag [#allocation4], %s298
        %s300 = sand.u32 %s34, 1
        %s301 = smul.addr %s300, 256
        %s302 = scalar_lea.vmem [#allocation3], %s301
        // Predicated region
        $region49: #{tpu_custom_call.1} parent=47 // pred_check
          %p303 = pneg %p47
        $region50: #{tpu_custom_call.1} parent=47 // pred_check_branch
          %305 = sbr.rel (%p303) target = $region52
        $region51: #{tpu_custom_call.1} parent=47 // pred_region
          %307 = dma.done %s299, 4096
        $region52: #{tpu_custom_call.1} parent=47 // pred_fallthru
          _
        // Predicated region
        $region53: #{tpu_custom_call.1} parent=47 // pred_check
          %p308 = pneg %p68
        $region54: #{tpu_custom_call.1} parent=47 // pred_check_branch
          %310 = sbr.rel (%p308) target = $region56
        $region55: #{tpu_custom_call.1} parent=47 // pred_region
          %312 = dma.done [#allocation7], 1024
        $region56: #{tpu_custom_call.1} parent=47 // pred_fallthru
          _
        // Predicated region
        $region57: #{tpu_custom_call.1} parent=47 // pred_check
          %p313 = pneg %p110
        $region58: #{tpu_custom_call.1} parent=47 // pred_check_branch
          %315 = sbr.rel (%p313) target = $region60
        $region59: #{tpu_custom_call.1} parent=47 // pred_region
          %317 = dma.done [#allocation7], 192
        $region60: #{tpu_custom_call.1} parent=47 // pred_fallthru
          _
        // Predicated region
        $region61: #{tpu_custom_call.1} parent=47 // pred_check
          %p318 = pneg %p152
        $region62: #{tpu_custom_call.1} parent=47 // pred_check_branch
          %320 = sbr.rel (%p318) target = $region64
        $region63: #{tpu_custom_call.1} parent=47 // pred_region
          %322 = dma.done [#allocation10], 1024
        $region64: #{tpu_custom_call.1} parent=47 // pred_fallthru
          _
        %s323 = sand.u32 %s34, 1
        %s324 = scalar_lea.sflag [#allocation4], %s323
        %s325 = sand.u32 %s34, 1
        %s326 = smul.addr %s325, 256
        %s327 = scalar_lea.vmem [#allocation3], %s326
        %p328 = pneg %p47
        %p329 = pneg %p44
        %p330 = pneg %p68
        %p331 = pneg %p65
        %p332 = pneg %p89
        %p333 = pneg %p86
        %p334 = pneg %p110
        %p335 = pneg %p107
        %p336 = pneg %p131
        %p337 = pneg %p128
        %p338 = pneg %p152
        %p339 = pneg %p149
        %p340 = pneg %p173
        %p341 = pneg %p170
        %p342 = pneg %p199
        %p343 = pneg %p196
        %s344 = sand.u32 %s186, 1
        %s345 = scalar_lea.sflag [#allocation5], %s344
        %s346 = sand.u32 %s186, 1
        %s347 = smul.addr %s346, 256
        %s348 = scalar_lea.vmem [#allocation11], %s347
        %v349 = vld [vmem:[%s302] sm:$0xff]
        %v350 = vld [vmem:[%s302 + $0x8] sm:$0xff]
        %v351 = vld [vmem:[%s302 + $0x10] sm:$0xff]
        %v352 = vld [vmem:[%s302 + $0x18] sm:$0xff]
        %v353 = vld [vmem:[%s302 + $0x20] sm:$0xff]
        %v354 = vld [vmem:[%s302 + $0x28] sm:$0xff]
        %v355 = vld [vmem:[%s302 + $0x30] sm:$0xff]
        %v356 = vld [vmem:[%s302 + $0x38] sm:$0xff]
        %v357 = vld [vmem:[%s302 + $0x40] sm:$0xff]
        %v358 = vld [vmem:[%s302 + $0x48] sm:$0xff]
        %v359 = vld [vmem:[%s302 + $0x50] sm:$0xff]
        %v360 = vld [vmem:[%s302 + $0x58] sm:$0xff]
        %v361 = vld [vmem:[%s302 + $0x60] sm:$0xff]
        %v362 = vld [vmem:[%s302 + $0x68] sm:$0xff]
        %v363 = vld [vmem:[%s302 + $0x70] sm:$0xff]
        %v364 = vld [vmem:[%s302 + $0x78] sm:$0xff]
        %v365 = vld [vmem:[%s302 + $0x80] sm:$0xff]
        %v366 = vld [vmem:[%s302 + $0x88] sm:$0xff]
        %v367 = vld [vmem:[%s302 + $0x90] sm:$0xff]
        %v368 = vld [vmem:[%s302 + $0x98] sm:$0xff]
        %v369 = vld [vmem:[%s302 + $0xa0] sm:$0xff]
        %v370 = vld [vmem:[%s302 + $0xa8] sm:$0xff]
        %v371 = vld [vmem:[%s302 + $0xb0] sm:$0xff]
        %v372 = vld [vmem:[%s302 + $0xb8] sm:$0xff]
        %v373 = vld [vmem:[%s302 + $0xc0] sm:$0xff]
        %v374 = vld [vmem:[%s302 + $0xc8] sm:$0xff]
        %v375 = vld [vmem:[%s302 + $0xd0] sm:$0xff]
        %v376 = vld [vmem:[%s302 + $0xd8] sm:$0xff]
        %v377 = vld [vmem:[%s302 + $0xe0] sm:$0xff]
        %v378 = vld [vmem:[%s302 + $0xe8] sm:$0xff]
        %v379 = vld [vmem:[%s302 + $0xf0] sm:$0xff]
        %v380 = vld [vmem:[%s302 + $0xf8] sm:$0xff]
        %v381 = vpack.c.bf16 %v350, %v349
        %v382 = vpack.c.bf16 %v352, %v351
        %v383 = vpack.c.bf16 %v354, %v353
        %v384 = vpack.c.bf16 %v356, %v355
        %v385 = vpack.c.bf16 %v358, %v357
        %v386 = vpack.c.bf16 %v360, %v359
        %v387 = vpack.c.bf16 %v362, %v361
        %v388 = vpack.c.bf16 %v364, %v363
        %v389 = vpack.c.bf16 %v366, %v365
        %v390 = vpack.c.bf16 %v368, %v367
        %v391 = vpack.c.bf16 %v370, %v369
        %v392 = vpack.c.bf16 %v372, %v371
        %v393 = vpack.c.bf16 %v374, %v373
        %v394 = vpack.c.bf16 %v376, %v375
        %v395 = vpack.c.bf16 %v378, %v377
        %v396 = vpack.c.bf16 %v380, %v379
        %v397 = vld [vmem:[#allocation6] sm:$0xf]
        %v398 = vld [vmem:[#allocation6 + $0x4] sm:$0xf]
        %v399 = vld [vmem:[#allocation6 + $0x8] sm:$0xf]
        %v400 = vld [vmem:[#allocation6 + $0xc] sm:$0xf]
        %v401 = vld [vmem:[#allocation6 + $0x10] sm:$0xf]
        %v402 = vld [vmem:[#allocation6 + $0x14] sm:$0xf]
        %v403 = vld [vmem:[#allocation6 + $0x18] sm:$0xf]
        %v404 = vld [vmem:[#allocation6 + $0x1c] sm:$0xf]
        %v405 = vld [vmem:[#allocation6 + $0x20] sm:$0xf]
        %v406 = vld [vmem:[#allocation6 + $0x24] sm:$0xf]
        %v407 = vld [vmem:[#allocation6 + $0x28] sm:$0xf]
        %v408 = vld [vmem:[#allocation6 + $0x2c] sm:$0xf]
        %v409 = vld [vmem:[#allocation6 + $0x30] sm:$0xf]
        %v410 = vld [vmem:[#allocation6 + $0x34] sm:$0xf]
        %v411 = vld [vmem:[#allocation6 + $0x38] sm:$0xf]
        %v412 = vld [vmem:[#allocation6 + $0x3c] sm:$0xf]
        %v413 = vld [vmem:[%s2] sm:$0x1]
        %v415 = vperm.slane %v413, 0
        %v433 = vunpack.c.l.b16 %v397
        %v434 = vunpack.c.l.b16 %v398
        %v435 = vunpack.c.l.b16 %v399
        %v436 = vunpack.c.l.b16 %v400
        %v437 = vunpack.c.l.b16 %v401
        %v438 = vunpack.c.l.b16 %v402
        %v439 = vunpack.c.l.b16 %v403
        %v440 = vunpack.c.l.b16 %v404
        %v441 = vunpack.c.l.b16 %v405
        %v442 = vunpack.c.l.b16 %v406
        %v443 = vunpack.c.l.b16 %v407
        %v444 = vunpack.c.l.b16 %v408
        %v445 = vunpack.c.l.b16 %v409
        %v446 = vunpack.c.l.b16 %v410
        %v447 = vunpack.c.l.b16 %v411
        %v448 = vunpack.c.l.b16 %v412
        %v449 = vpack.c.b16 %v434, %v433
        %v450 = vpack.c.b16 %v436, %v435
        %v451 = vpack.c.b16 %v438, %v437
        %v452 = vpack.c.b16 %v440, %v439
        %v453 = vpack.c.b16 %v442, %v441
        %v454 = vpack.c.b16 %v444, %v443
        %v455 = vpack.c.b16 %v446, %v445
        %v456 = vpack.c.b16 %v448, %v447
        %465 = vmatpush.bf16.msra.mxu0 %v456
        %466 = vmatpush.bf16.msra.mxu0 %v455
        %467 = vmatpush.bf16.msra.mxu0 %v454
        %468 = vmatpush.bf16.msra.mxu0 %v453
        %469 = vmatpush.bf16.msra.mxu0 %v452
        %470 = vmatpush.bf16.msra.mxu0 %v451
        %471 = vmatpush.bf16.msra.mxu0 %v450
        %472 = vmatpush.bf16.msra.mxu0 %v449
        %473 = vmatmul.bf16.gmra.mxu0 %v381
        %v474 = vpop.f32.mrf.mxu0
        %v475 = vadd.f32 %v415, %v474
        %v476 = vpop.f32.mrf.mxu0
        %v477 = vadd.f32 %v415, %v476
        %478 = vmatmul.bf16.gmra.mxu0 %v382
        %v479 = vpop.f32.mrf.mxu0
        %v480 = vadd.f32 %v415, %v479
        %v481 = vpop.f32.mrf.mxu0
        %v482 = vadd.f32 %v415, %v481
        %483 = vmatmul.bf16.gmra.mxu0 %v383
        %v484 = vpop.f32.mrf.mxu0
        %v485 = vadd.f32 %v415, %v484
        %v486 = vpop.f32.mrf.mxu0
        %v487 = vadd.f32 %v415, %v486
        %488 = vmatmul.bf16.gmra.mxu0 %v384
        %v489 = vpop.f32.mrf.mxu0
        %v490 = vadd.f32 %v415, %v489
        %v491 = vpop.f32.mrf.mxu0
        %v492 = vadd.f32 %v415, %v491
        %493 = vmatmul.bf16.gmra.mxu0 %v385
        %v494 = vpop.f32.mrf.mxu0
        %v495 = vadd.f32 %v415, %v494
        %v496 = vpop.f32.mrf.mxu0
        %v497 = vadd.f32 %v415, %v496
        %498 = vmatmul.bf16.gmra.mxu0 %v386
        %v499 = vpop.f32.mrf.mxu0
        %v500 = vadd.f32 %v415, %v499
        %v501 = vpop.f32.mrf.mxu0
        %v502 = vadd.f32 %v415, %v501
        %503 = vmatmul.bf16.gmra.mxu0 %v387
        %v504 = vpop.f32.mrf.mxu0
        %v505 = vadd.f32 %v415, %v504
        %v506 = vpop.f32.mrf.mxu0
        %v507 = vadd.f32 %v415, %v506
        %508 = vmatmul.bf16.gmra.mxu0 %v388
        %v509 = vpop.f32.mrf.mxu0
        %v510 = vadd.f32 %v415, %v509
        %v511 = vpop.f32.mrf.mxu0
        %v512 = vadd.f32 %v415, %v511
        %513 = vmatmul.bf16.gmra.mxu0 %v389
        %v514 = vpop.f32.mrf.mxu0
        %v515 = vadd.f32 %v415, %v514
        %v516 = vpop.f32.mrf.mxu0
        %v517 = vadd.f32 %v415, %v516
        %518 = vmatmul.bf16.gmra.mxu0 %v390
        %v519 = vpop.f32.mrf.mxu0
        %v520 = vadd.f32 %v415, %v519
        %v521 = vpop.f32.mrf.mxu0
        %v522 = vadd.f32 %v415, %v521
        %523 = vmatmul.bf16.gmra.mxu0 %v391
        %v524 = vpop.f32.mrf.mxu0
        %v525 = vadd.f32 %v415, %v524
        %v526 = vpop.f32.mrf.mxu0
        %v527 = vadd.f32 %v415, %v526
        %528 = vmatmul.bf16.gmra.mxu0 %v392
        %v529 = vpop.f32.mrf.mxu0
        %v530 = vadd.f32 %v415, %v529
        %v531 = vpop.f32.mrf.mxu0
        %v532 = vadd.f32 %v415, %v531
        %533 = vmatmul.bf16.gmra.mxu0 %v393
        %v534 = vpop.f32.mrf.mxu0
        %v535 = vadd.f32 %v415, %v534
        %v536 = vpop.f32.mrf.mxu0
        %v537 = vadd.f32 %v415, %v536
        %538 = vmatmul.bf16.gmra.mxu0 %v394
        %v539 = vpop.f32.mrf.mxu0
        %v540 = vadd.f32 %v415, %v539
        %v541 = vpop.f32.mrf.mxu0
        %v542 = vadd.f32 %v415, %v541
        %543 = vmatmul.bf16.gmra.mxu0 %v395
        %v544 = vpop.f32.mrf.mxu0
        %v545 = vadd.f32 %v415, %v544
        %v546 = vpop.f32.mrf.mxu0
        %v547 = vadd.f32 %v415, %v546
        %548 = vmatmul.bf16.gmra.mxu0 %v396
        %v549 = vpop.f32.mrf.mxu0
        %v550 = vadd.f32 %v415, %v549
        %v551 = vpop.f32.mrf.mxu0
        %v552 = vadd.f32 %v415, %v551
        %553 = vdwg.mxu0
        %v554 = vmax.f32 %v475, 0.0
        %v555 = vmax.f32 %v477, 0.0
        %v556 = vmax.f32 %v480, 0.0
        %v557 = vmax.f32 %v482, 0.0
        %v558 = vmax.f32 %v485, 0.0
        %v559 = vmax.f32 %v487, 0.0
        %v560 = vmax.f32 %v490, 0.0
        %v561 = vmax.f32 %v492, 0.0
        %v562 = vmax.f32 %v495, 0.0
        %v563 = vmax.f32 %v497, 0.0
        %v564 = vmax.f32 %v500, 0.0
        %v565 = vmax.f32 %v502, 0.0
        %v566 = vmax.f32 %v505, 0.0
        %v567 = vmax.f32 %v507, 0.0
        %v568 = vmax.f32 %v510, 0.0
        %v569 = vmax.f32 %v512, 0.0
        %v570 = vmax.f32 %v515, 0.0
        %v571 = vmax.f32 %v517, 0.0
        %v572 = vmax.f32 %v520, 0.0
        %v573 = vmax.f32 %v522, 0.0
        %v574 = vmax.f32 %v525, 0.0
        %v575 = vmax.f32 %v527, 0.0
        %v576 = vmax.f32 %v530, 0.0
        %v577 = vmax.f32 %v532, 0.0
        %v578 = vmax.f32 %v535, 0.0
        %v579 = vmax.f32 %v537, 0.0
        %v580 = vmax.f32 %v540, 0.0
        %v581 = vmax.f32 %v542, 0.0
        %v582 = vmax.f32 %v545, 0.0
        %v583 = vmax.f32 %v547, 0.0
        %v584 = vmax.f32 %v550, 0.0
        %v585 = vmax.f32 %v552, 0.0
        %v586 = vld [vmem:[#allocation8] sm:$0x7]
        %v587 = vld [vmem:[#allocation8 + $0x4] sm:$0x7]
        %v588 = vld [vmem:[#allocation8 + $0x8] sm:$0x7]
        %589 = vst [vmem:[#allocation2 + $0x7] sm:$0x1] 0.0
        %590 = vst [vmem:[#allocation2 + $0x27] sm:$0x1] 0.0
        %591 = vst [vmem:[#allocation2 + $0x47] sm:$0x1] 0.0
        %592 = vst [vmem:[#allocation2 + $0x67] sm:$0x1] 0.0
        %593 = vst [vmem:[#allocation2 + $0x87] sm:$0x1] 0.0
        %594 = vst [vmem:[#allocation2 + $0xa7] sm:$0x1] 0.0
        %595 = vst [vmem:[#allocation2 + $0xc7] sm:$0x1] 0.0
        %596 = vst [vmem:[#allocation2 + $0xe7] sm:$0x1] 0.0
        %597 = vst [vmem:[#allocation2 + $0x107] sm:$0x1] 0.0
        %598 = vst [vmem:[#allocation2 + $0x127] sm:$0x1] 0.0
        %599 = vst [vmem:[#allocation2 + $0x147] sm:$0x1] 0.0
        %600 = vst [vmem:[#allocation2 + $0x167] sm:$0x1] 0.0
        %601 = vst [vmem:[#allocation2 + $0x187] sm:$0x1] 0.0
        %602 = vst [vmem:[#allocation2 + $0x1a7] sm:$0x1] 0.0
        %603 = vst [vmem:[#allocation2 + $0x1c7] sm:$0x1] 0.0
        %604 = vst [vmem:[#allocation2 + $0x1e7] sm:$0x1] 0.0
        %605 = vst [vmem:[#allocation2 + $0x18] sm:$0x1] 0.0
        %606 = vst [vmem:[#allocation2 + $0x38] sm:$0x1] 0.0
        %607 = vst [vmem:[#allocation2 + $0x58] sm:$0x1] 0.0
        %608 = vst [vmem:[#allocation2 + $0x78] sm:$0x1] 0.0
        %609 = vst [vmem:[#allocation2 + $0x98] sm:$0x1] 0.0
        %610 = vst [vmem:[#allocation2 + $0xb8] sm:$0x1] 0.0
        %611 = vst [vmem:[#allocation2 + $0xd8] sm:$0x1] 0.0
        %612 = vst [vmem:[#allocation2 + $0xf8] sm:$0x1] 0.0
        %613 = vst [vmem:[#allocation2 + $0x118] sm:$0x1] 0.0
        %614 = vst [vmem:[#allocation2 + $0x138] sm:$0x1] 0.0
        %615 = vst [vmem:[#allocation2 + $0x158] sm:$0x1] 0.0
        %616 = vst [vmem:[#allocation2 + $0x178] sm:$0x1] 0.0
        %617 = vst [vmem:[#allocation2 + $0x198] sm:$0x1] 0.0
        %618 = vst [vmem:[#allocation2 + $0x1b8] sm:$0x1] 0.0
        %619 = vst [vmem:[#allocation2 + $0x1d8] sm:$0x1] 0.0
        %620 = vst [vmem:[#allocation2 + $0x1f8] sm:$0x1] 0.0
        %621 = vst [vmem:[#allocation2 + $0x8] sm:$0xff] %v554
        %622 = vst [vmem:[#allocation2 + $0x10] sm:$0xff] %v555
        %623 = vst [vmem:[#allocation2 + $0x28] sm:$0xff] %v556
        %624 = vst [vmem:[#allocation2 + $0x30] sm:$0xff] %v557
        %625 = vst [vmem:[#allocation2 + $0x48] sm:$0xff] %v558
        %626 = vst [vmem:[#allocation2 + $0x50] sm:$0xff] %v559
        %627 = vst [vmem:[#allocation2 + $0x68] sm:$0xff] %v560
        %628 = vst [vmem:[#allocation2 + $0x70] sm:$0xff] %v561
        %629 = vst [vmem:[#allocation2 + $0x88] sm:$0xff] %v562
        %630 = vst [vmem:[#allocation2 + $0x90] sm:$0xff] %v563
        %631 = vst [vmem:[#allocation2 + $0xa8] sm:$0xff] %v564
        %632 = vst [vmem:[#allocation2 + $0xb0] sm:$0xff] %v565
        %633 = vst [vmem:[#allocation2 + $0xc8] sm:$0xff] %v566
        %634 = vst [vmem:[#allocation2 + $0xd0] sm:$0xff] %v567
        %635 = vst [vmem:[#allocation2 + $0xe8] sm:$0xff] %v568
        %636 = vst [vmem:[#allocation2 + $0xf0] sm:$0xff] %v569
        %637 = vst [vmem:[#allocation2 + $0x108] sm:$0xff] %v570
        %638 = vst [vmem:[#allocation2 + $0x110] sm:$0xff] %v571
        %639 = vst [vmem:[#allocation2 + $0x128] sm:$0xff] %v572
        %640 = vst [vmem:[#allocation2 + $0x130] sm:$0xff] %v573
        %641 = vst [vmem:[#allocation2 + $0x148] sm:$0xff] %v574
        %642 = vst [vmem:[#allocation2 + $0x150] sm:$0xff] %v575
        %643 = vst [vmem:[#allocation2 + $0x168] sm:$0xff] %v576
        %644 = vst [vmem:[#allocation2 + $0x170] sm:$0xff] %v577
        %645 = vst [vmem:[#allocation2 + $0x188] sm:$0xff] %v578
        %646 = vst [vmem:[#allocation2 + $0x190] sm:$0xff] %v579
        %647 = vst [vmem:[#allocation2 + $0x1a8] sm:$0xff] %v580
        %648 = vst [vmem:[#allocation2 + $0x1b0] sm:$0xff] %v581
        %649 = vst [vmem:[#allocation2 + $0x1c8] sm:$0xff] %v582
        %650 = vst [vmem:[#allocation2 + $0x1d0] sm:$0xff] %v583
        %651 = vst [vmem:[#allocation2 + $0x1e8] sm:$0xff] %v584
        %652 = vst [vmem:[#allocation2 + $0x1f0] sm:$0xff] %v585
        %v653 = vld [vmem:[#allocation2 + $0x7] sm:$0xff]
        %v654 = vld [vmem:[#allocation2 + $0xf] sm:$0xff]
        %v655 = vld [vmem:[#allocation2 + $0x27] sm:$0xff]
        %v656 = vld [vmem:[#allocation2 + $0x2f] sm:$0xff]
        %v657 = vld [vmem:[#allocation2 + $0x47] sm:$0xff]
        %v658 = vld [vmem:[#allocation2 + $0x4f] sm:$0xff]
        %v659 = vld [vmem:[#allocation2 + $0x67] sm:$0xff]
        %v660 = vld [vmem:[#allocation2 + $0x6f] sm:$0xff]
        %v661 = vld [vmem:[#allocation2 + $0x87] sm:$0xff]
        %v662 = vld [vmem:[#allocation2 + $0x8f] sm:$0xff]
        %v663 = vld [vmem:[#allocation2 + $0xa7] sm:$0xff]
        %v664 = vld [vmem:[#allocation2 + $0xaf] sm:$0xff]
        %v665 = vld [vmem:[#allocation2 + $0xc7] sm:$0xff]
        %v666 = vld [vmem:[#allocation2 + $0xcf] sm:$0xff]
        %v667 = vld [vmem:[#allocation2 + $0xe7] sm:$0xff]
        %v668 = vld [vmem:[#allocation2 + $0xef] sm:$0xff]
        %v669 = vld [vmem:[#allocation2 + $0x107] sm:$0xff]
        %v670 = vld [vmem:[#allocation2 + $0x10f] sm:$0xff]
        %v671 = vld [vmem:[#allocation2 + $0x127] sm:$0xff]
        %v672 = vld [vmem:[#allocation2 + $0x12f] sm:$0xff]
        %v673 = vld [vmem:[#allocation2 + $0x147] sm:$0xff]
        %v674 = vld [vmem:[#allocation2 + $0x14f] sm:$0xff]
        %v675 = vld [vmem:[#allocation2 + $0x167] sm:$0xff]
        %v676 = vld [vmem:[#allocation2 + $0x16f] sm:$0xff]
        %v677 = vld [vmem:[#allocation2 + $0x187] sm:$0xff]
        %v678 = vld [vmem:[#allocation2 + $0x18f] sm:$0xff]
        %v679 = vld [vmem:[#allocation2 + $0x1a7] sm:$0xff]
        %v680 = vld [vmem:[#allocation2 + $0x1af] sm:$0xff]
        %v681 = vld [vmem:[#allocation2 + $0x1c7] sm:$0xff]
        %v682 = vld [vmem:[#allocation2 + $0x1cf] sm:$0xff]
        %v683 = vld [vmem:[#allocation2 + $0x1e7] sm:$0xff]
        %v684 = vld [vmem:[#allocation2 + $0x1ef] sm:$0xff]
        %v685 = vld [vmem:[#allocation2 + $0x9] sm:$0xff]
        %v686 = vld [vmem:[#allocation2 + $0x11] sm:$0xff]
        %v687 = vld [vmem:[#allocation2 + $0x29] sm:$0xff]
        %v688 = vld [vmem:[#allocation2 + $0x31] sm:$0xff]
        %v689 = vld [vmem:[#allocation2 + $0x49] sm:$0xff]
        %v690 = vld [vmem:[#allocation2 + $0x51] sm:$0xff]
        %v691 = vld [vmem:[#allocation2 + $0x69] sm:$0xff]
        %v692 = vld [vmem:[#allocation2 + $0x71] sm:$0xff]
        %v693 = vld [vmem:[#allocation2 + $0x89] sm:$0xff]
        %v694 = vld [vmem:[#allocation2 + $0x91] sm:$0xff]
        %v695 = vld [vmem:[#allocation2 + $0xa9] sm:$0xff]
        %v696 = vld [vmem:[#allocation2 + $0xb1] sm:$0xff]
        %v697 = vld [vmem:[#allocation2 + $0xc9] sm:$0xff]
        %v698 = vld [vmem:[#allocation2 + $0xd1] sm:$0xff]
        %v699 = vld [vmem:[#allocation2 + $0xe9] sm:$0xff]
        %v700 = vld [vmem:[#allocation2 + $0xf1] sm:$0xff]
        %v701 = vld [vmem:[#allocation2 + $0x109] sm:$0xff]
        %v702 = vld [vmem:[#allocation2 + $0x111] sm:$0xff]
        %v703 = vld [vmem:[#allocation2 + $0x129] sm:$0xff]
        %v704 = vld [vmem:[#allocation2 + $0x131] sm:$0xff]
        %v705 = vld [vmem:[#allocation2 + $0x149] sm:$0xff]
        %v706 = vld [vmem:[#allocation2 + $0x151] sm:$0xff]
        %v707 = vld [vmem:[#allocation2 + $0x169] sm:$0xff]
        %v708 = vld [vmem:[#allocation2 + $0x171] sm:$0xff]
        %v709 = vld [vmem:[#allocation2 + $0x189] sm:$0xff]
        %v710 = vld [vmem:[#allocation2 + $0x191] sm:$0xff]
        %v711 = vld [vmem:[#allocation2 + $0x1a9] sm:$0xff]
        %v712 = vld [vmem:[#allocation2 + $0x1b1] sm:$0xff]
        %v713 = vld [vmem:[#allocation2 + $0x1c9] sm:$0xff]
        %v714 = vld [vmem:[#allocation2 + $0x1d1] sm:$0xff]
        %v715 = vld [vmem:[#allocation2 + $0x1e9] sm:$0xff]
        %v716 = vld [vmem:[#allocation2 + $0x1f1] sm:$0xff]
        %v717 = vperm.slane %v586, 0
        %v718 = vmul.f32 %v717, 0.0
        %v719 = vmul.f32 %v653, %v717
        %v720 = vmul.f32 %v654, %v717
        %v721 = vmul.f32 %v655, %v717
        %v722 = vmul.f32 %v656, %v717
        %v723 = vmul.f32 %v657, %v717
        %v724 = vmul.f32 %v658, %v717
        %v725 = vmul.f32 %v659, %v717
        %v726 = vmul.f32 %v660, %v717
        %v727 = vmul.f32 %v661, %v717
        %v728 = vmul.f32 %v662, %v717
        %v729 = vmul.f32 %v663, %v717
        %v730 = vmul.f32 %v664, %v717
        %v731 = vmul.f32 %v665, %v717
        %v732 = vmul.f32 %v666, %v717
        %v733 = vmul.f32 %v667, %v717
        %v734 = vmul.f32 %v668, %v717
        %v735 = vmul.f32 %v669, %v717
        %v736 = vmul.f32 %v670, %v717
        %v737 = vmul.f32 %v671, %v717
        %v738 = vmul.f32 %v672, %v717
        %v739 = vmul.f32 %v673, %v717
        %v740 = vmul.f32 %v674, %v717
        %v741 = vmul.f32 %v675, %v717
        %v742 = vmul.f32 %v676, %v717
        %v743 = vmul.f32 %v677, %v717
        %v744 = vmul.f32 %v678, %v717
        %v745 = vmul.f32 %v679, %v717
        %v746 = vmul.f32 %v680, %v717
        %v747 = vmul.f32 %v681, %v717
        %v748 = vmul.f32 %v682, %v717
        %v749 = vadd.f32 %v718, 0.0
        %v750 = vadd.f32 %v719, 0.0
        %v751 = vadd.f32 %v720, 0.0
        %v752 = vadd.f32 %v721, 0.0
        %v753 = vadd.f32 %v722, 0.0
        %v754 = vadd.f32 %v723, 0.0
        %v755 = vadd.f32 %v724, 0.0
        %v756 = vadd.f32 %v725, 0.0
        %v757 = vadd.f32 %v726, 0.0
        %v758 = vadd.f32 %v727, 0.0
        %v759 = vadd.f32 %v728, 0.0
        %v760 = vadd.f32 %v729, 0.0
        %v761 = vadd.f32 %v730, 0.0
        %v762 = vadd.f32 %v731, 0.0
        %v763 = vadd.f32 %v732, 0.0
        %v764 = vadd.f32 %v733, 0.0
        %v765 = vadd.f32 %v734, 0.0
        %v766 = vadd.f32 %v735, 0.0
        %v767 = vadd.f32 %v736, 0.0
        %v768 = vadd.f32 %v737, 0.0
        %v769 = vadd.f32 %v738, 0.0
        %v770 = vadd.f32 %v739, 0.0
        %v771 = vadd.f32 %v740, 0.0
        %v772 = vadd.f32 %v741, 0.0
        %v773 = vadd.f32 %v742, 0.0
        %v774 = vadd.f32 %v743, 0.0
        %v775 = vadd.f32 %v744, 0.0
        %v776 = vadd.f32 %v745, 0.0
        %v777 = vadd.f32 %v746, 0.0
        %v778 = vadd.f32 %v747, 0.0
        %v779 = vadd.f32 %v748, 0.0
        %v780 = vperm.slane %v587, 0
        %v781 = vmul.f32 %v653, %v780
        %v782 = vmul.f32 %v654, %v780
        %v783 = vmul.f32 %v655, %v780
        %v784 = vmul.f32 %v656, %v780
        %v785 = vmul.f32 %v657, %v780
        %v786 = vmul.f32 %v658, %v780
        %v787 = vmul.f32 %v659, %v780
        %v788 = vmul.f32 %v660, %v780
        %v789 = vmul.f32 %v661, %v780
        %v790 = vmul.f32 %v662, %v780
        %v791 = vmul.f32 %v663, %v780
        %v792 = vmul.f32 %v664, %v780
        %v793 = vmul.f32 %v665, %v780
        %v794 = vmul.f32 %v666, %v780
        %v795 = vmul.f32 %v667, %v780
        %v796 = vmul.f32 %v668, %v780
        %v797 = vmul.f32 %v669, %v780
        %v798 = vmul.f32 %v670, %v780
        %v799 = vmul.f32 %v671, %v780
        %v800 = vmul.f32 %v672, %v780
        %v801 = vmul.f32 %v673, %v780
        %v802 = vmul.f32 %v674, %v780
        %v803 = vmul.f32 %v675, %v780
        %v804 = vmul.f32 %v676, %v780
        %v805 = vmul.f32 %v677, %v780
        %v806 = vmul.f32 %v678, %v780
        %v807 = vmul.f32 %v679, %v780
        %v808 = vmul.f32 %v680, %v780
        %v809 = vmul.f32 %v681, %v780
        %v810 = vmul.f32 %v682, %v780
        %v811 = vmul.f32 %v683, %v780
        %v812 = vmul.f32 %v684, %v780
        %v813 = vadd.f32 %v749, %v781
        %v814 = vadd.f32 %v749, %v782
        %v815 = vadd.f32 %v750, %v783
        %v816 = vadd.f32 %v751, %v784
        %v817 = vadd.f32 %v752, %v785
        %v818 = vadd.f32 %v753, %v786
        %v819 = vadd.f32 %v754, %v787
        %v820 = vadd.f32 %v755, %v788
        %v821 = vadd.f32 %v756, %v789
        %v822 = vadd.f32 %v757, %v790
        %v823 = vadd.f32 %v758, %v791
        %v824 = vadd.f32 %v759, %v792
        %v825 = vadd.f32 %v760, %v793
        %v826 = vadd.f32 %v761, %v794
        %v827 = vadd.f32 %v762, %v795
        %v828 = vadd.f32 %v763, %v796
        %v829 = vadd.f32 %v764, %v797
        %v830 = vadd.f32 %v765, %v798
        %v831 = vadd.f32 %v766, %v799
        %v832 = vadd.f32 %v767, %v800
        %v833 = vadd.f32 %v768, %v801
        %v834 = vadd.f32 %v769, %v802
        %v835 = vadd.f32 %v770, %v803
        %v836 = vadd.f32 %v771, %v804
        %v837 = vadd.f32 %v772, %v805
        %v838 = vadd.f32 %v773, %v806
        %v839 = vadd.f32 %v774, %v807
        %v840 = vadd.f32 %v775, %v808
        %v841 = vadd.f32 %v776, %v809
        %v842 = vadd.f32 %v777, %v810
        %v843 = vadd.f32 %v778, %v811
        %v844 = vadd.f32 %v779, %v812
        %v845 = vperm.slane %v588, 0
        %v846 = vmul.f32 %v655, %v845
        %v847 = vmul.f32 %v656, %v845
        %v848 = vmul.f32 %v657, %v845
        %v849 = vmul.f32 %v658, %v845
        %v850 = vmul.f32 %v659, %v845
        %v851 = vmul.f32 %v660, %v845
        %v852 = vmul.f32 %v661, %v845
        %v853 = vmul.f32 %v662, %v845
        %v854 = vmul.f32 %v663, %v845
        %v855 = vmul.f32 %v664, %v845
        %v856 = vmul.f32 %v665, %v845
        %v857 = vmul.f32 %v666, %v845
        %v858 = vmul.f32 %v667, %v845
        %v859 = vmul.f32 %v668, %v845
        %v860 = vmul.f32 %v669, %v845
        %v861 = vmul.f32 %v670, %v845
        %v862 = vmul.f32 %v671, %v845
        %v863 = vmul.f32 %v672, %v845
        %v864 = vmul.f32 %v673, %v845
        %v865 = vmul.f32 %v674, %v845
        %v866 = vmul.f32 %v675, %v845
        %v867 = vmul.f32 %v676, %v845
        %v868 = vmul.f32 %v677, %v845
        %v869 = vmul.f32 %v678, %v845
        %v870 = vmul.f32 %v679, %v845
        %v871 = vmul.f32 %v680, %v845
        %v872 = vmul.f32 %v681, %v845
        %v873 = vmul.f32 %v682, %v845
        %v874 = vmul.f32 %v683, %v845
        %v875 = vmul.f32 %v684, %v845
        %v876 = vmul.f32 %v845, 0.0
        %v877 = vadd.f32 %v813, %v846
        %v878 = vadd.f32 %v814, %v847
        %v879 = vadd.f32 %v815, %v848
        %v880 = vadd.f32 %v816, %v849
        %v881 = vadd.f32 %v817, %v850
        %v882 = vadd.f32 %v818, %v851
        %v883 = vadd.f32 %v819, %v852
        %v884 = vadd.f32 %v820, %v853
        %v885 = vadd.f32 %v821, %v854
        %v886 = vadd.f32 %v822, %v855
        %v887 = vadd.f32 %v823, %v856
        %v888 = vadd.f32 %v824, %v857
        %v889 = vadd.f32 %v825, %v858
        %v890 = vadd.f32 %v826, %v859
        %v891 = vadd.f32 %v827, %v860
        %v892 = vadd.f32 %v828, %v861
        %v893 = vadd.f32 %v829, %v862
        %v894 = vadd.f32 %v830, %v863
        %v895 = vadd.f32 %v831, %v864
        %v896 = vadd.f32 %v832, %v865
        %v897 = vadd.f32 %v833, %v866
        %v898 = vadd.f32 %v834, %v867
        %v899 = vadd.f32 %v835, %v868
        %v900 = vadd.f32 %v836, %v869
        %v901 = vadd.f32 %v837, %v870
        %v902 = vadd.f32 %v838, %v871
        %v903 = vadd.f32 %v839, %v872
        %v904 = vadd.f32 %v840, %v873
        %v905 = vadd.f32 %v841, %v874
        %v906 = vadd.f32 %v842, %v875
        %v907 = vadd.f32 %v843, %v876
        %v908 = vadd.f32 %v844, %v876
        %v909 = vperm.slane %v586, 1
        %v910 = vmul.f32 %v909, 0.0
        %v911 = vmul.f32 %v554, %v909
        %v912 = vmul.f32 %v555, %v909
        %v913 = vmul.f32 %v556, %v909
        %v914 = vmul.f32 %v557, %v909
        %v915 = vmul.f32 %v558, %v909
        %v916 = vmul.f32 %v559, %v909
        %v917 = vmul.f32 %v560, %v909
        %v918 = vmul.f32 %v561, %v909
        %v919 = vmul.f32 %v562, %v909
        %v920 = vmul.f32 %v563, %v909
        %v921 = vmul.f32 %v564, %v909
        %v922 = vmul.f32 %v565, %v909
        %v923 = vmul.f32 %v566, %v909
        %v924 = vmul.f32 %v567, %v909
        %v925 = vmul.f32 %v568, %v909
        %v926 = vmul.f32 %v569, %v909
        %v927 = vmul.f32 %v570, %v909
        %v928 = vmul.f32 %v571, %v909
        %v929 = vmul.f32 %v572, %v909
        %v930 = vmul.f32 %v573, %v909
        %v931 = vmul.f32 %v574, %v909
        %v932 = vmul.f32 %v575, %v909
        %v933 = vmul.f32 %v576, %v909
        %v934 = vmul.f32 %v577, %v909
        %v935 = vmul.f32 %v578, %v909
        %v936 = vmul.f32 %v579, %v909
        %v937 = vmul.f32 %v580, %v909
        %v938 = vmul.f32 %v581, %v909
        %v939 = vmul.f32 %v582, %v909
        %v940 = vmul.f32 %v583, %v909
        %v941 = vadd.f32 %v877, %v910
        %v942 = vadd.f32 %v878, %v910
        %v943 = vadd.f32 %v879, %v911
        %v944 = vadd.f32 %v880, %v912
        %v945 = vadd.f32 %v881, %v913
        %v946 = vadd.f32 %v882, %v914
        %v947 = vadd.f32 %v883, %v915
        %v948 = vadd.f32 %v884, %v916
        %v949 = vadd.f32 %v885, %v917
        %v950 = vadd.f32 %v886, %v918
        %v951 = vadd.f32 %v887, %v919
        %v952 = vadd.f32 %v888, %v920
        %v953 = vadd.f32 %v889, %v921
        %v954 = vadd.f32 %v890, %v922
        %v955 = vadd.f32 %v891, %v923
        %v956 = vadd.f32 %v892, %v924
        %v957 = vadd.f32 %v893, %v925
        %v958 = vadd.f32 %v894, %v926
        %v959 = vadd.f32 %v895, %v927
        %v960 = vadd.f32 %v896, %v928
        %v961 = vadd.f32 %v897, %v929
        %v962 = vadd.f32 %v898, %v930
        %v963 = vadd.f32 %v899, %v931
        %v964 = vadd.f32 %v900, %v932
        %v965 = vadd.f32 %v901, %v933
        %v966 = vadd.f32 %v902, %v934
        %v967 = vadd.f32 %v903, %v935
        %v968 = vadd.f32 %v904, %v936
        %v969 = vadd.f32 %v905, %v937
        %v970 = vadd.f32 %v906, %v938
        %v971 = vadd.f32 %v907, %v939
        %v972 = vadd.f32 %v908, %v940
        %v973 = vperm.slane %v587, 1
        %v974 = vmul.f32 %v554, %v973
        %v975 = vmul.f32 %v555, %v973
        %v976 = vmul.f32 %v556, %v973
        %v977 = vmul.f32 %v557, %v973
        %v978 = vmul.f32 %v558, %v973
        %v979 = vmul.f32 %v559, %v973
        %v980 = vmul.f32 %v560, %v973
        %v981 = vmul.f32 %v561, %v973
        %v982 = vmul.f32 %v562, %v973
        %v983 = vmul.f32 %v563, %v973
        %v984 = vmul.f32 %v564, %v973
        %v985 = vmul.f32 %v565, %v973
        %v986 = vmul.f32 %v566, %v973
        %v987 = vmul.f32 %v567, %v973
        %v988 = vmul.f32 %v568, %v973
        %v989 = vmul.f32 %v569, %v973
        %v990 = vmul.f32 %v570, %v973
        %v991 = vmul.f32 %v571, %v973
        %v992 = vmul.f32 %v572, %v973
        %v993 = vmul.f32 %v573, %v973
        %v994 = vmul.f32 %v574, %v973
        %v995 = vmul.f32 %v575, %v973
        %v996 = vmul.f32 %v576, %v973
        %v997 = vmul.f32 %v577, %v973
        %v998 = vmul.f32 %v578, %v973
        %v999 = vmul.f32 %v579, %v973
        %v1000 = vmul.f32 %v580, %v973
        %v1001 = vmul.f32 %v581, %v973
        %v1002 = vmul.f32 %v582, %v973
        %v1003 = vmul.f32 %v583, %v973
        %v1004 = vmul.f32 %v584, %v973
        %v1005 = vmul.f32 %v585, %v973
        %v1006 = vadd.f32 %v941, %v974
        %v1007 = vadd.f32 %v942, %v975
        %v1008 = vadd.f32 %v943, %v976
        %v1009 = vadd.f32 %v944, %v977
        %v1010 = vadd.f32 %v945, %v978
        %v1011 = vadd.f32 %v946, %v979
        %v1012 = vadd.f32 %v947, %v980
        %v1013 = vadd.f32 %v948, %v981
        %v1014 = vadd.f32 %v949, %v982
        %v1015 = vadd.f32 %v950, %v983
        %v1016 = vadd.f32 %v951, %v984
        %v1017 = vadd.f32 %v952, %v985
        %v1018 = vadd.f32 %v953, %v986
        %v1019 = vadd.f32 %v954, %v987
        %v1020 = vadd.f32 %v955, %v988
        %v1021 = vadd.f32 %v956, %v989
        %v1022 = vadd.f32 %v957, %v990
        %v1023 = vadd.f32 %v958, %v991
        %v1024 = vadd.f32 %v959, %v992
        %v1025 = vadd.f32 %v960, %v993
        %v1026 = vadd.f32 %v961, %v994
        %v1027 = vadd.f32 %v962, %v995
        %v1028 = vadd.f32 %v963, %v996
        %v1029 = vadd.f32 %v964, %v997
        %v1030 = vadd.f32 %v965, %v998
        %v1031 = vadd.f32 %v966, %v999
        %v1032 = vadd.f32 %v967, %v1000
        %v1033 = vadd.f32 %v968, %v1001
        %v1034 = vadd.f32 %v969, %v1002
        %v1035 = vadd.f32 %v970, %v1003
        %v1036 = vadd.f32 %v971, %v1004
        %v1037 = vadd.f32 %v972, %v1005
        %v1038 = vperm.slane %v588, 1
        %v1039 = vmul.f32 %v556, %v1038
        %v1040 = vmul.f32 %v557, %v1038
        %v1041 = vmul.f32 %v558, %v1038
        %v1042 = vmul.f32 %v559, %v1038
        %v1043 = vmul.f32 %v560, %v1038
        %v1044 = vmul.f32 %v561, %v1038
        %v1045 = vmul.f32 %v562, %v1038
        %v1046 = vmul.f32 %v563, %v1038
        %v1047 = vmul.f32 %v564, %v1038
        %v1048 = vmul.f32 %v565, %v1038
        %v1049 = vmul.f32 %v566, %v1038
        %v1050 = vmul.f32 %v567, %v1038
        %v1051 = vmul.f32 %v568, %v1038
        %v1052 = vmul.f32 %v569, %v1038
        %v1053 = vmul.f32 %v570, %v1038
        %v1054 = vmul.f32 %v571, %v1038
        %v1055 = vmul.f32 %v572, %v1038
        %v1056 = vmul.f32 %v573, %v1038
        %v1057 = vmul.f32 %v574, %v1038
        %v1058 = vmul.f32 %v575, %v1038
        %v1059 = vmul.f32 %v576, %v1038
        %v1060 = vmul.f32 %v577, %v1038
        %v1061 = vmul.f32 %v578, %v1038
        %v1062 = vmul.f32 %v579, %v1038
        %v1063 = vmul.f32 %v580, %v1038
        %v1064 = vmul.f32 %v581, %v1038
        %v1065 = vmul.f32 %v582, %v1038
        %v1066 = vmul.f32 %v583, %v1038
        %v1067 = vmul.f32 %v584, %v1038
        %v1068 = vmul.f32 %v585, %v1038
        %v1069 = vmul.f32 %v1038, 0.0
        %v1070 = vadd.f32 %v1006, %v1039
        %v1071 = vadd.f32 %v1007, %v1040
        %v1072 = vadd.f32 %v1008, %v1041
        %v1073 = vadd.f32 %v1009, %v1042
        %v1074 = vadd.f32 %v1010, %v1043
        %v1075 = vadd.f32 %v1011, %v1044
        %v1076 = vadd.f32 %v1012, %v1045
        %v1077 = vadd.f32 %v1013, %v1046
        %v1078 = vadd.f32 %v1014, %v1047
        %v1079 = vadd.f32 %v1015, %v1048
        %v1080 = vadd.f32 %v1016, %v1049
        %v1081 = vadd.f32 %v1017, %v1050
        %v1082 = vadd.f32 %v1018, %v1051
        %v1083 = vadd.f32 %v1019, %v1052
        %v1084 = vadd.f32 %v1020, %v1053
        %v1085 = vadd.f32 %v1021, %v1054
        %v1086 = vadd.f32 %v1022, %v1055
        %v1087 = vadd.f32 %v1023, %v1056
        %v1088 = vadd.f32 %v1024, %v1057
        %v1089 = vadd.f32 %v1025, %v1058
        %v1090 = vadd.f32 %v1026, %v1059
        %v1091 = vadd.f32 %v1027, %v1060
        %v1092 = vadd.f32 %v1028, %v1061
        %v1093 = vadd.f32 %v1029, %v1062
        %v1094 = vadd.f32 %v1030, %v1063
        %v1095 = vadd.f32 %v1031, %v1064
        %v1096 = vadd.f32 %v1032, %v1065
        %v1097 = vadd.f32 %v1033, %v1066
        %v1098 = vadd.f32 %v1034, %v1067
        %v1099 = vadd.f32 %v1035, %v1068
        %v1100 = vadd.f32 %v1036, %v1069
        %v1101 = vadd.f32 %v1037, %v1069
        %v1102 = vperm.slane %v586, 2
        %v1103 = vmul.f32 %v1102, 0.0
        %v1104 = vmul.f32 %v685, %v1102
        %v1105 = vmul.f32 %v686, %v1102
        %v1106 = vmul.f32 %v687, %v1102
        %v1107 = vmul.f32 %v688, %v1102
        %v1108 = vmul.f32 %v689, %v1102
        %v1109 = vmul.f32 %v690, %v1102
        %v1110 = vmul.f32 %v691, %v1102
        %v1111 = vmul.f32 %v692, %v1102
        %v1112 = vmul.f32 %v693, %v1102
        %v1113 = vmul.f32 %v694, %v1102
        %v1114 = vmul.f32 %v695, %v1102
        %v1115 = vmul.f32 %v696, %v1102
        %v1116 = vmul.f32 %v697, %v1102
        %v1117 = vmul.f32 %v698, %v1102
        %v1118 = vmul.f32 %v699, %v1102
        %v1119 = vmul.f32 %v700, %v1102
        %v1120 = vmul.f32 %v701, %v1102
        %v1121 = vmul.f32 %v702, %v1102
        %v1122 = vmul.f32 %v703, %v1102
        %v1123 = vmul.f32 %v704, %v1102
        %v1124 = vmul.f32 %v705, %v1102
        %v1125 = vmul.f32 %v706, %v1102
        %v1126 = vmul.f32 %v707, %v1102
        %v1127 = vmul.f32 %v708, %v1102
        %v1128 = vmul.f32 %v709, %v1102
        %v1129 = vmul.f32 %v710, %v1102
        %v1130 = vmul.f32 %v711, %v1102
        %v1131 = vmul.f32 %v712, %v1102
        %v1132 = vmul.f32 %v713, %v1102
        %v1133 = vmul.f32 %v714, %v1102
        %v1134 = vadd.f32 %v1070, %v1103
        %v1135 = vadd.f32 %v1071, %v1103
        %v1136 = vadd.f32 %v1072, %v1104
        %v1137 = vadd.f32 %v1073, %v1105
        %v1138 = vadd.f32 %v1074, %v1106
        %v1139 = vadd.f32 %v1075, %v1107
        %v1140 = vadd.f32 %v1076, %v1108
        %v1141 = vadd.f32 %v1077, %v1109
        %v1142 = vadd.f32 %v1078, %v1110
        %v1143 = vadd.f32 %v1079, %v1111
        %v1144 = vadd.f32 %v1080, %v1112
        %v1145 = vadd.f32 %v1081, %v1113
        %v1146 = vadd.f32 %v1082, %v1114
        %v1147 = vadd.f32 %v1083, %v1115
        %v1148 = vadd.f32 %v1084, %v1116
        %v1149 = vadd.f32 %v1085, %v1117
        %v1150 = vadd.f32 %v1086, %v1118
        %v1151 = vadd.f32 %v1087, %v1119
        %v1152 = vadd.f32 %v1088, %v1120
        %v1153 = vadd.f32 %v1089, %v1121
        %v1154 = vadd.f32 %v1090, %v1122
        %v1155 = vadd.f32 %v1091, %v1123
        %v1156 = vadd.f32 %v1092, %v1124
        %v1157 = vadd.f32 %v1093, %v1125
        %v1158 = vadd.f32 %v1094, %v1126
        %v1159 = vadd.f32 %v1095, %v1127
        %v1160 = vadd.f32 %v1096, %v1128
        %v1161 = vadd.f32 %v1097, %v1129
        %v1162 = vadd.f32 %v1098, %v1130
        %v1163 = vadd.f32 %v1099, %v1131
        %v1164 = vadd.f32 %v1100, %v1132
        %v1165 = vadd.f32 %v1101, %v1133
        %v1166 = vperm.slane %v587, 2
        %v1167 = vmul.f32 %v685, %v1166
        %v1168 = vmul.f32 %v686, %v1166
        %v1169 = vmul.f32 %v687, %v1166
        %v1170 = vmul.f32 %v688, %v1166
        %v1171 = vmul.f32 %v689, %v1166
        %v1172 = vmul.f32 %v690, %v1166
        %v1173 = vmul.f32 %v691, %v1166
        %v1174 = vmul.f32 %v692, %v1166
        %v1175 = vmul.f32 %v693, %v1166
        %v1176 = vmul.f32 %v694, %v1166
        %v1177 = vmul.f32 %v695, %v1166
        %v1178 = vmul.f32 %v696, %v1166
        %v1179 = vmul.f32 %v697, %v1166
        %v1180 = vmul.f32 %v698, %v1166
        %v1181 = vmul.f32 %v699, %v1166
        %v1182 = vmul.f32 %v700, %v1166
        %v1183 = vmul.f32 %v701, %v1166
        %v1184 = vmul.f32 %v702, %v1166
        %v1185 = vmul.f32 %v703, %v1166
        %v1186 = vmul.f32 %v704, %v1166
        %v1187 = vmul.f32 %v705, %v1166
        %v1188 = vmul.f32 %v706, %v1166
        %v1189 = vmul.f32 %v707, %v1166
        %v1190 = vmul.f32 %v708, %v1166
        %v1191 = vmul.f32 %v709, %v1166
        %v1192 = vmul.f32 %v710, %v1166
        %v1193 = vmul.f32 %v711, %v1166
        %v1194 = vmul.f32 %v712, %v1166
        %v1195 = vmul.f32 %v713, %v1166
        %v1196 = vmul.f32 %v714, %v1166
        %v1197 = vmul.f32 %v715, %v1166
        %v1198 = vmul.f32 %v716, %v1166
        %v1199 = vadd.f32 %v1134, %v1167
        %v1200 = vadd.f32 %v1135, %v1168
        %v1201 = vadd.f32 %v1136, %v1169
        %v1202 = vadd.f32 %v1137, %v1170
        %v1203 = vadd.f32 %v1138, %v1171
        %v1204 = vadd.f32 %v1139, %v1172
        %v1205 = vadd.f32 %v1140, %v1173
        %v1206 = vadd.f32 %v1141, %v1174
        %v1207 = vadd.f32 %v1142, %v1175
        %v1208 = vadd.f32 %v1143, %v1176
        %v1209 = vadd.f32 %v1144, %v1177
        %v1210 = vadd.f32 %v1145, %v1178
        %v1211 = vadd.f32 %v1146, %v1179
        %v1212 = vadd.f32 %v1147, %v1180
        %v1213 = vadd.f32 %v1148, %v1181
        %v1214 = vadd.f32 %v1149, %v1182
        %v1215 = vadd.f32 %v1150, %v1183
        %v1216 = vadd.f32 %v1151, %v1184
        %v1217 = vadd.f32 %v1152, %v1185
        %v1218 = vadd.f32 %v1153, %v1186
        %v1219 = vadd.f32 %v1154, %v1187
        %v1220 = vadd.f32 %v1155, %v1188
        %v1221 = vadd.f32 %v1156, %v1189
        %v1222 = vadd.f32 %v1157, %v1190
        %v1223 = vadd.f32 %v1158, %v1191
        %v1224 = vadd.f32 %v1159, %v1192
        %v1225 = vadd.f32 %v1160, %v1193
        %v1226 = vadd.f32 %v1161, %v1194
        %v1227 = vadd.f32 %v1162, %v1195
        %v1228 = vadd.f32 %v1163, %v1196
        %v1229 = vadd.f32 %v1164, %v1197
        %v1230 = vadd.f32 %v1165, %v1198
        %v1231 = vperm.slane %v588, 2
        %v1232 = vmul.f32 %v687, %v1231
        %v1233 = vmul.f32 %v688, %v1231
        %v1234 = vmul.f32 %v689, %v1231
        %v1235 = vmul.f32 %v690, %v1231
        %v1236 = vmul.f32 %v691, %v1231
        %v1237 = vmul.f32 %v692, %v1231
        %v1238 = vmul.f32 %v693, %v1231
        %v1239 = vmul.f32 %v694, %v1231
        %v1240 = vmul.f32 %v695, %v1231
        %v1241 = vmul.f32 %v696, %v1231
        %v1242 = vmul.f32 %v697, %v1231
        %v1243 = vmul.f32 %v698, %v1231
        %v1244 = vmul.f32 %v699, %v1231
        %v1245 = vmul.f32 %v700, %v1231
        %v1246 = vmul.f32 %v701, %v1231
        %v1247 = vmul.f32 %v702, %v1231
        %v1248 = vmul.f32 %v703, %v1231
        %v1249 = vmul.f32 %v704, %v1231
        %v1250 = vmul.f32 %v705, %v1231
        %v1251 = vmul.f32 %v706, %v1231
        %v1252 = vmul.f32 %v707, %v1231
        %v1253 = vmul.f32 %v708, %v1231
        %v1254 = vmul.f32 %v709, %v1231
        %v1255 = vmul.f32 %v710, %v1231
        %v1256 = vmul.f32 %v711, %v1231
        %v1257 = vmul.f32 %v712, %v1231
        %v1258 = vmul.f32 %v713, %v1231
        %v1259 = vmul.f32 %v714, %v1231
        %v1260 = vmul.f32 %v715, %v1231
        %v1261 = vmul.f32 %v716, %v1231
        %v1262 = vmul.f32 %v1231, 0.0
        %v1263 = vadd.f32 %v1199, %v1232
        %v1264 = vadd.f32 %v1200, %v1233
        %v1265 = vadd.f32 %v1201, %v1234
        %v1266 = vadd.f32 %v1202, %v1235
        %v1267 = vadd.f32 %v1203, %v1236
        %v1268 = vadd.f32 %v1204, %v1237
        %v1269 = vadd.f32 %v1205, %v1238
        %v1270 = vadd.f32 %v1206, %v1239
        %v1271 = vadd.f32 %v1207, %v1240
        %v1272 = vadd.f32 %v1208, %v1241
        %v1273 = vadd.f32 %v1209, %v1242
        %v1274 = vadd.f32 %v1210, %v1243
        %v1275 = vadd.f32 %v1211, %v1244
        %v1276 = vadd.f32 %v1212, %v1245
        %v1277 = vadd.f32 %v1213, %v1246
        %v1278 = vadd.f32 %v1214, %v1247
        %v1279 = vadd.f32 %v1215, %v1248
        %v1280 = vadd.f32 %v1216, %v1249
        %v1281 = vadd.f32 %v1217, %v1250
        %v1282 = vadd.f32 %v1218, %v1251
        %v1283 = vadd.f32 %v1219, %v1252
        %v1284 = vadd.f32 %v1220, %v1253
        %v1285 = vadd.f32 %v1221, %v1254
        %v1286 = vadd.f32 %v1222, %v1255
        %v1287 = vadd.f32 %v1223, %v1256
        %v1288 = vadd.f32 %v1224, %v1257
        %v1289 = vadd.f32 %v1225, %v1258
        %v1290 = vadd.f32 %v1226, %v1259
        %v1291 = vadd.f32 %v1227, %v1260
        %v1292 = vadd.f32 %v1228, %v1261
        %v1293 = vadd.f32 %v1229, %v1262
        %v1294 = vadd.f32 %v1230, %v1262
        %v1295 = vld [vmem:[%s4] sm:$0x1]
        %v1297 = vperm.slane %v1295, 0
        %v1299 = vadd.f32 %v1263, %v1297
        %v1300 = vadd.f32 %v1264, %v1297
        %v1301 = vadd.f32 %v1265, %v1297
        %v1302 = vadd.f32 %v1266, %v1297
        %v1303 = vadd.f32 %v1267, %v1297
        %v1304 = vadd.f32 %v1268, %v1297
        %v1305 = vadd.f32 %v1269, %v1297
        %v1306 = vadd.f32 %v1270, %v1297
        %v1307 = vadd.f32 %v1271, %v1297
        %v1308 = vadd.f32 %v1272, %v1297
        %v1309 = vadd.f32 %v1273, %v1297
        %v1310 = vadd.f32 %v1274, %v1297
        %v1311 = vadd.f32 %v1275, %v1297
        %v1312 = vadd.f32 %v1276, %v1297
        %v1313 = vadd.f32 %v1277, %v1297
        %v1314 = vadd.f32 %v1278, %v1297
        %v1315 = vadd.f32 %v1279, %v1297
        %v1316 = vadd.f32 %v1280, %v1297
        %v1317 = vadd.f32 %v1281, %v1297
        %v1318 = vadd.f32 %v1282, %v1297
        %v1319 = vadd.f32 %v1283, %v1297
        %v1320 = vadd.f32 %v1284, %v1297
        %v1321 = vadd.f32 %v1285, %v1297
        %v1322 = vadd.f32 %v1286, %v1297
        %v1323 = vadd.f32 %v1287, %v1297
        %v1324 = vadd.f32 %v1288, %v1297
        %v1325 = vadd.f32 %v1289, %v1297
        %v1326 = vadd.f32 %v1290, %v1297
        %v1327 = vadd.f32 %v1291, %v1297
        %v1328 = vadd.f32 %v1292, %v1297
        %v1329 = vadd.f32 %v1293, %v1297
        %v1330 = vadd.f32 %v1294, %v1297
        %v1331 = vmax.f32 %v1299, 0.0
        %v1332 = vmax.f32 %v1300, 0.0
        %v1333 = vmax.f32 %v1301, 0.0
        %v1334 = vmax.f32 %v1302, 0.0
        %v1335 = vmax.f32 %v1303, 0.0
        %v1336 = vmax.f32 %v1304, 0.0
        %v1337 = vmax.f32 %v1305, 0.0
        %v1338 = vmax.f32 %v1306, 0.0
        %v1339 = vmax.f32 %v1307, 0.0
        %v1340 = vmax.f32 %v1308, 0.0
        %v1341 = vmax.f32 %v1309, 0.0
        %v1342 = vmax.f32 %v1310, 0.0
        %v1343 = vmax.f32 %v1311, 0.0
        %v1344 = vmax.f32 %v1312, 0.0
        %v1345 = vmax.f32 %v1313, 0.0
        %v1346 = vmax.f32 %v1314, 0.0
        %v1347 = vmax.f32 %v1315, 0.0
        %v1348 = vmax.f32 %v1316, 0.0
        %v1349 = vmax.f32 %v1317, 0.0
        %v1350 = vmax.f32 %v1318, 0.0
        %v1351 = vmax.f32 %v1319, 0.0
        %v1352 = vmax.f32 %v1320, 0.0
        %v1353 = vmax.f32 %v1321, 0.0
        %v1354 = vmax.f32 %v1322, 0.0
        %v1355 = vmax.f32 %v1323, 0.0
        %v1356 = vmax.f32 %v1324, 0.0
        %v1357 = vmax.f32 %v1325, 0.0
        %v1358 = vmax.f32 %v1326, 0.0
        %v1359 = vmax.f32 %v1327, 0.0
        %v1360 = vmax.f32 %v1328, 0.0
        %v1361 = vmax.f32 %v1329, 0.0
        %v1362 = vmax.f32 %v1330, 0.0
        %v1363 = vpack.c.bf16 %v1332, %v1331
        %v1364 = vpack.c.bf16 %v1334, %v1333
        %v1365 = vpack.c.bf16 %v1336, %v1335
        %v1366 = vpack.c.bf16 %v1338, %v1337
        %v1367 = vpack.c.bf16 %v1340, %v1339
        %v1368 = vpack.c.bf16 %v1342, %v1341
        %v1369 = vpack.c.bf16 %v1344, %v1343
        %v1370 = vpack.c.bf16 %v1346, %v1345
        %v1371 = vpack.c.bf16 %v1348, %v1347
        %v1372 = vpack.c.bf16 %v1350, %v1349
        %v1373 = vpack.c.bf16 %v1352, %v1351
        %v1374 = vpack.c.bf16 %v1354, %v1353
        %v1375 = vpack.c.bf16 %v1356, %v1355
        %v1376 = vpack.c.bf16 %v1358, %v1357
        %v1377 = vpack.c.bf16 %v1360, %v1359
        %v1378 = vpack.c.bf16 %v1362, %v1361
        %v1379 = vld [vmem:[#allocation9] sm:$0xf]
        %v1380 = vld [vmem:[#allocation9 + $0x4] sm:$0xf]
        %v1381 = vld [vmem:[#allocation9 + $0x8] sm:$0xf]
        %v1382 = vld [vmem:[#allocation9 + $0xc] sm:$0xf]
        %v1383 = vld [vmem:[#allocation9 + $0x10] sm:$0xf]
        %v1384 = vld [vmem:[#allocation9 + $0x14] sm:$0xf]
        %v1385 = vld [vmem:[#allocation9 + $0x18] sm:$0xf]
        %v1386 = vld [vmem:[#allocation9 + $0x1c] sm:$0xf]
        %v1387 = vld [vmem:[#allocation9 + $0x20] sm:$0xf]
        %v1388 = vld [vmem:[#allocation9 + $0x24] sm:$0xf]
        %v1389 = vld [vmem:[#allocation9 + $0x28] sm:$0xf]
        %v1390 = vld [vmem:[#allocation9 + $0x2c] sm:$0xf]
        %v1391 = vld [vmem:[#allocation9 + $0x30] sm:$0xf]
        %v1392 = vld [vmem:[#allocation9 + $0x34] sm:$0xf]
        %v1393 = vld [vmem:[#allocation9 + $0x38] sm:$0xf]
        %v1394 = vld [vmem:[#allocation9 + $0x3c] sm:$0xf]
        %v1395 = vld [vmem:[%s6] sm:$0x1]
        %v1397 = vperm.slane %v1395, 0
        %v1415 = vunpack.c.l.b16 %v1379
        %v1416 = vunpack.c.l.b16 %v1380
        %v1417 = vunpack.c.l.b16 %v1381
        %v1418 = vunpack.c.l.b16 %v1382
        %v1419 = vunpack.c.l.b16 %v1383
        %v1420 = vunpack.c.l.b16 %v1384
        %v1421 = vunpack.c.l.b16 %v1385
        %v1422 = vunpack.c.l.b16 %v1386
        %v1423 = vunpack.c.l.b16 %v1387
        %v1424 = vunpack.c.l.b16 %v1388
        %v1425 = vunpack.c.l.b16 %v1389
        %v1426 = vunpack.c.l.b16 %v1390
        %v1427 = vunpack.c.l.b16 %v1391
        %v1428 = vunpack.c.l.b16 %v1392
        %v1429 = vunpack.c.l.b16 %v1393
        %v1430 = vunpack.c.l.b16 %v1394
        %v1431 = vpack.c.b16 %v1416, %v1415
        %v1432 = vpack.c.b16 %v1418, %v1417
        %v1433 = vpack.c.b16 %v1420, %v1419
        %v1434 = vpack.c.b16 %v1422, %v1421
        %v1435 = vpack.c.b16 %v1424, %v1423
        %v1436 = vpack.c.b16 %v1426, %v1425
        %v1437 = vpack.c.b16 %v1428, %v1427
        %v1438 = vpack.c.b16 %v1430, %v1429
        %1447 = vmatpush.bf16.msra.mxu0 %v1438
        %1448 = vmatpush.bf16.msra.mxu0 %v1437
        %1449 = vmatpush.bf16.msra.mxu0 %v1436
        %1450 = vmatpush.bf16.msra.mxu0 %v1435
        %1451 = vmatpush.bf16.msra.mxu0 %v1434
        %1452 = vmatpush.bf16.msra.mxu0 %v1433
        %1453 = vmatpush.bf16.msra.mxu0 %v1432
        %1454 = vmatpush.bf16.msra.mxu0 %v1431
        %1455 = vmatmul.bf16.gmra.mxu0 %v1363
        %v1456 = vpop.f32.mrf.mxu0
        %v1457 = vadd.f32 %v1397, %v1456
        %v1458 = vpop.f32.mrf.mxu0
        %v1459 = vadd.f32 %v1397, %v1458
        %1460 = vmatmul.bf16.gmra.mxu0 %v1364
        %v1461 = vpop.f32.mrf.mxu0
        %v1462 = vadd.f32 %v1397, %v1461
        %v1463 = vpop.f32.mrf.mxu0
        %v1464 = vadd.f32 %v1397, %v1463
        %1465 = vmatmul.bf16.gmra.mxu0 %v1365
        %v1466 = vpop.f32.mrf.mxu0
        %v1467 = vadd.f32 %v1397, %v1466
        %v1468 = vpop.f32.mrf.mxu0
        %v1469 = vadd.f32 %v1397, %v1468
        %1470 = vmatmul.bf16.gmra.mxu0 %v1366
        %v1471 = vpop.f32.mrf.mxu0
        %v1472 = vadd.f32 %v1397, %v1471
        %v1473 = vpop.f32.mrf.mxu0
        %v1474 = vadd.f32 %v1397, %v1473
        %1475 = vmatmul.bf16.gmra.mxu0 %v1367
        %v1476 = vpop.f32.mrf.mxu0
        %v1477 = vadd.f32 %v1397, %v1476
        %v1478 = vpop.f32.mrf.mxu0
        %v1479 = vadd.f32 %v1397, %v1478
        %1480 = vmatmul.bf16.gmra.mxu0 %v1368
        %v1481 = vpop.f32.mrf.mxu0
        %v1482 = vadd.f32 %v1397, %v1481
        %v1483 = vpop.f32.mrf.mxu0
        %v1484 = vadd.f32 %v1397, %v1483
        %1485 = vmatmul.bf16.gmra.mxu0 %v1369
        %v1486 = vpop.f32.mrf.mxu0
        %v1487 = vadd.f32 %v1397, %v1486
        %v1488 = vpop.f32.mrf.mxu0
        %v1489 = vadd.f32 %v1397, %v1488
        %1490 = vmatmul.bf16.gmra.mxu0 %v1370
        %v1491 = vpop.f32.mrf.mxu0
        %v1492 = vadd.f32 %v1397, %v1491
        %v1493 = vpop.f32.mrf.mxu0
        %v1494 = vadd.f32 %v1397, %v1493
        %1495 = vmatmul.bf16.gmra.mxu0 %v1371
        %v1496 = vpop.f32.mrf.mxu0
        %v1497 = vadd.f32 %v1397, %v1496
        %v1498 = vpop.f32.mrf.mxu0
        %v1499 = vadd.f32 %v1397, %v1498
        %1500 = vmatmul.bf16.gmra.mxu0 %v1372
        %v1501 = vpop.f32.mrf.mxu0
        %v1502 = vadd.f32 %v1397, %v1501
        %v1503 = vpop.f32.mrf.mxu0
        %v1504 = vadd.f32 %v1397, %v1503
        %1505 = vmatmul.bf16.gmra.mxu0 %v1373
        %v1506 = vpop.f32.mrf.mxu0
        %v1507 = vadd.f32 %v1397, %v1506
        %v1508 = vpop.f32.mrf.mxu0
        %v1509 = vadd.f32 %v1397, %v1508
        %1510 = vmatmul.bf16.gmra.mxu0 %v1374
        %v1511 = vpop.f32.mrf.mxu0
        %v1512 = vadd.f32 %v1397, %v1511
        %v1513 = vpop.f32.mrf.mxu0
        %v1514 = vadd.f32 %v1397, %v1513
        %1515 = vmatmul.bf16.gmra.mxu0 %v1375
        %v1516 = vpop.f32.mrf.mxu0
        %v1517 = vadd.f32 %v1397, %v1516
        %v1518 = vpop.f32.mrf.mxu0
        %v1519 = vadd.f32 %v1397, %v1518
        %1520 = vmatmul.bf16.gmra.mxu0 %v1376
        %v1521 = vpop.f32.mrf.mxu0
        %v1522 = vadd.f32 %v1397, %v1521
        %v1523 = vpop.f32.mrf.mxu0
        %v1524 = vadd.f32 %v1397, %v1523
        %1525 = vmatmul.bf16.gmra.mxu0 %v1377
        %v1526 = vpop.f32.mrf.mxu0
        %v1527 = vadd.f32 %v1397, %v1526
        %v1528 = vpop.f32.mrf.mxu0
        %v1529 = vadd.f32 %v1397, %v1528
        %1530 = vmatmul.bf16.gmra.mxu0 %v1378
        %v1531 = vpop.f32.mrf.mxu0
        %v1532 = vadd.f32 %v1397, %v1531
        %v1533 = vpop.f32.mrf.mxu0
        %v1534 = vadd.f32 %v1397, %v1533
        %1535 = vdwg.mxu0
        %v1536 = vadd.f32 %v1457, %v349
        %v1537 = vadd.f32 %v1459, %v350
        %v1538 = vadd.f32 %v1462, %v351
        %v1539 = vadd.f32 %v1464, %v352
        %v1540 = vadd.f32 %v1467, %v353
        %v1541 = vadd.f32 %v1469, %v354
        %v1542 = vadd.f32 %v1472, %v355
        %v1543 = vadd.f32 %v1474, %v356
        %v1544 = vadd.f32 %v1477, %v357
        %v1545 = vadd.f32 %v1479, %v358
        %v1546 = vadd.f32 %v1482, %v359
        %v1547 = vadd.f32 %v1484, %v360
        %v1548 = vadd.f32 %v1487, %v361
        %v1549 = vadd.f32 %v1489, %v362
        %v1550 = vadd.f32 %v1492, %v363
        %v1551 = vadd.f32 %v1494, %v364
        %v1552 = vadd.f32 %v1497, %v365
        %v1553 = vadd.f32 %v1499, %v366
        %v1554 = vadd.f32 %v1502, %v367
        %v1555 = vadd.f32 %v1504, %v368
        %v1556 = vadd.f32 %v1507, %v369
        %v1557 = vadd.f32 %v1509, %v370
        %v1558 = vadd.f32 %v1512, %v371
        %v1559 = vadd.f32 %v1514, %v372
        %v1560 = vadd.f32 %v1517, %v373
        %v1561 = vadd.f32 %v1519, %v374
        %v1562 = vadd.f32 %v1522, %v375
        %v1563 = vadd.f32 %v1524, %v376
        %v1564 = vadd.f32 %v1527, %v377
        %v1565 = vadd.f32 %v1529, %v378
        %v1566 = vadd.f32 %v1532, %v379
        %v1567 = vadd.f32 %v1534, %v380
        %1568 = vst [vmem:[%s348] sm:$0xff] %v1536
        %1569 = vst [vmem:[%s348 + $0x8] sm:$0xff] %v1537
        %1570 = vst [vmem:[%s348 + $0x10] sm:$0xff] %v1538
        %1571 = vst [vmem:[%s348 + $0x18] sm:$0xff] %v1539
        %1572 = vst [vmem:[%s348 + $0x20] sm:$0xff] %v1540
        %1573 = vst [vmem:[%s348 + $0x28] sm:$0xff] %v1541
        %1574 = vst [vmem:[%s348 + $0x30] sm:$0xff] %v1542
        %1575 = vst [vmem:[%s348 + $0x38] sm:$0xff] %v1543
        %1576 = vst [vmem:[%s348 + $0x40] sm:$0xff] %v1544
        %1577 = vst [vmem:[%s348 + $0x48] sm:$0xff] %v1545
        %1578 = vst [vmem:[%s348 + $0x50] sm:$0xff] %v1546
        %1579 = vst [vmem:[%s348 + $0x58] sm:$0xff] %v1547
        %1580 = vst [vmem:[%s348 + $0x60] sm:$0xff] %v1548
        %1581 = vst [vmem:[%s348 + $0x68] sm:$0xff] %v1549
        %1582 = vst [vmem:[%s348 + $0x70] sm:$0xff] %v1550
        %1583 = vst [vmem:[%s348 + $0x78] sm:$0xff] %v1551
        %1584 = vst [vmem:[%s348 + $0x80] sm:$0xff] %v1552
        %1585 = vst [vmem:[%s348 + $0x88] sm:$0xff] %v1553
        %1586 = vst [vmem:[%s348 + $0x90] sm:$0xff] %v1554
        %1587 = vst [vmem:[%s348 + $0x98] sm:$0xff] %v1555
        %1588 = vst [vmem:[%s348 + $0xa0] sm:$0xff] %v1556
        %1589 = vst [vmem:[%s348 + $0xa8] sm:$0xff] %v1557
        %1590 = vst [vmem:[%s348 + $0xb0] sm:$0xff] %v1558
        %1591 = vst [vmem:[%s348 + $0xb8] sm:$0xff] %v1559
        %1592 = vst [vmem:[%s348 + $0xc0] sm:$0xff] %v1560
        %1593 = vst [vmem:[%s348 + $0xc8] sm:$0xff] %v1561
        %1594 = vst [vmem:[%s348 + $0xd0] sm:$0xff] %v1562
        %1595 = vst [vmem:[%s348 + $0xd8] sm:$0xff] %v1563
        %1596 = vst [vmem:[%s348 + $0xe0] sm:$0xff] %v1564
        %1597 = vst [vmem:[%s348 + $0xe8] sm:$0xff] %v1565
        %1598 = vst [vmem:[%s348 + $0xf0] sm:$0xff] %v1566
        %1599 = vst [vmem:[%s348 + $0xf8] sm:$0xff] %v1567
        %s1600 = sand.u32 %s186, 1
        %s1601 = scalar_lea.sflag [#allocation5], %s1600
        %s1602 = sand.u32 %s186, 1
        %s1603 = smul.addr %s1602, 256
        %s1604 = scalar_lea.vmem [#allocation11], %s1603
        // Predicated region
        $region65: #{tpu_custom_call.1} parent=47 // pred_check
          %p1605 = pneg %p196
        $region66: #{tpu_custom_call.1} parent=47 // pred_check_branch
          %1607 = sbr.rel (%p1605) target = $region68
        $region67: #{tpu_custom_call.1} parent=47 // pred_region
          %1609 = vsyncadd %s1601, 0
          %s1610 = smul.addr %s26, 32
          %s1611 = smul.addr %s1610, 8
          %s1612 = scalar_lea.hbm %s7, %s1611
          %s1613 = sshll.u32 %s1604, 4
          %s1614 = int_to_ptr.vmem [resolvable:$true] %s1613
          %s1615 = sshll.u32 %s1612, 4
          %s1616 = int_to_ptr.hbm [resolvable:$true] %s1615
          %1621 = dma.vmem_to_hbm [thread:$0]  %s1614, 4096, %s1616, %s1601, 128, 128, 8
        $region68: #{tpu_custom_call.1} parent=47 // pred_fallthru
          _
      $region48: #{tpu_custom_call.1} parent=5 // pred_fallthru
        _
      %p1622 = scmp.le.s32.totalorder 2, %s21
      // Predicated region
      $region69: #{tpu_custom_call.1} parent=5 // pred_check
        %p1623 = pneg %p1622
      $region70: #{tpu_custom_call.1} parent=5 // pred_check_branch
        %1625 = sbr.rel (%p1623) target = $region72
      $region71: #{tpu_custom_call.1} parent=5 // pred_region
        %s1626 = ssub.s32 %s21, 2
        // Predicated region
        $region73: #{tpu_custom_call.1} parent=71 // pred_check
          %p1627 = pneg %p202
        $region74: #{tpu_custom_call.1} parent=71 // pred_check_branch
          %1629 = sbr.rel (%p1627) target = $region76
        $region75: #{tpu_custom_call.1} parent=71 // pred_region
          %s1630 = sand.u32 %s187, 1
          %s1631 = scalar_lea.sflag [#allocation5], %s1630
          %s1632 = sand.u32 %s187, 1
          %s1633 = smul.addr %s1632, 256
          %s1634 = scalar_lea.vmem [#allocation11], %s1633
          %1636 = dma.done %s1631, 4096
        $region76: #{tpu_custom_call.1} parent=71 // pred_fallthru
          _
      $region72: #{tpu_custom_call.1} parent=5 // pred_fallthru
        _
    $region6: #{tpu_custom_call.1} parent=1 // loop_footer
      %s25 = sadd.s32 1, %s21
    $region7: #{tpu_custom_call.1} parent=1 // loop_footer_branch
      %20 = sbr.rel target = $region3
    $region8: #{tpu_custom_call.1} parent=1 // loop_exit
      _
    %1637 = vsyncpa [#allocation4], 1
    %s1638 = scalar_lea.sflag [#allocation4], 1
    %1639 = vsyncpa %s1638, 1
    %1640 = vsyncpa [#allocation7], 1
    %1641 = vsyncpa [#allocation10], 1
    %1642 = vsyncpa [#allocation5], 1
    %s1643 = scalar_lea.sflag [#allocation5], 1
    %1644 = vsyncpa %s1643, 1

</llo_original>
